<compile_context>
chip_gen: v7x
topology: tpu7x:2x2x1
jax: 0.10.0
libtpu: 0.0.40
codegen_flags: <defaults>
</compile_context>

<pallas_src>
import functools

import jax
import jax.numpy as jnp
from jax.experimental import pallas as pl
from jax.experimental.pallas import tpu as pltpu


_LABEL_SENTINEL = jnp.iinfo(jnp.int32).min  # padded labels; never matches real labels


def _round_up(x, m):
    return ((x + m - 1) // m) * m


def _supcon_kernel(fq_ref, fk_ref, qlab_ref, klab_ref, colmask_ref,   # inputs
                   loss_ref, valid_ref,                               # outputs
                   l_sc, sps_sc, npos_sc, diag_sc,                    # scratch
                   *, inv_temp, temperature, scale_by_temperature, padded, blk):
    qi = pl.program_id(0)
    ki = pl.program_id(1)
    nk = pl.num_programs(1)

    @pl.when(ki == 0)
    def _init():
        l_sc[...] = jnp.zeros(l_sc.shape, dtype=jnp.float32)
        sps_sc[...] = jnp.zeros(sps_sc.shape, dtype=jnp.float32)
        npos_sc[...] = jnp.zeros(npos_sc.shape, dtype=jnp.float32)
        diag_sc[...] = jnp.full(diag_sc.shape, inv_temp, dtype=jnp.float32)

    # Features are already L2-normalized (wrapper).  NT contraction -> no
    # explicit transpose; f32 accumulation regardless of the input dtype.
    s = jax.lax.dot_general(
        fq_ref[...], fk_ref[...],
        dimension_numbers=(((1,), (1,)), ((), ())),
        preferred_element_type=jnp.float32) * inv_temp            # [blk, blk]

    # Positives (incl. self) built from int32 labels; sentinel-padded key
    # labels never match a real query label.
    same = (qlab_ref[...] == klab_ref[...]).astype(jnp.float32)   # [blk,1]==[1,blk]

    # Static row max: sim_ii = ||f_i||^2 / T = 1/T >= sim_ij after L2 norm, so
    # the reference's rowwise max-subtraction is exactly `- inv_temp` (the loss
    # is shift-invariant, so tiny fp deviations of the true diag don't matter).
    p = jnp.exp(s - inv_temp)                                     # [blk, blk]
    if padded:
        p = p * colmask_ref[...]                                  # zero padded key columns

    l_sc[...] += jnp.sum(p, axis=1, keepdims=True)
    sps_sc[...] += jnp.sum(s * same, axis=1, keepdims=True)
    npos_sc[...] += jnp.sum(same, axis=1, keepdims=True)

    # Capture the actually-computed diagonal once per query tile (qi == ki) so
    # the self-term removal in _finalize cancels exactly against l_sc.
    @pl.when(qi == ki)
    def _grab_diag():
        eye = (jax.lax.broadcasted_iota(jnp.int32, (blk, blk), 0)
               == jax.lax.broadcasted_iota(jnp.int32, (blk, blk), 1))
        diag_sc[...] = jnp.sum(jnp.where(eye, s, 0.0), axis=1, keepdims=True)

    @pl.when(ki == nk - 1)
    def _finalize():
        diag = diag_sc[...]                                       # [blk, 1]
        # denominator = sum_{j != i} exp(s_ij - 1/T): remove the self term with
        # the exact diagonal captured above.
        denom = l_sc[...] - jnp.exp(diag - inv_temp)
        # positives exclude the self pair.
        num_pos = npos_sc[...] - 1.0
        valid = num_pos > 0.0
        safe_np = jnp.where(valid, num_pos, 1.0)
        # denom <= 0 only occurs for degenerate/padded rows (the reference would
        # raise on the resulting NaN); neutralize it instead.
        safe_denom = jnp.where(denom > 0.0, denom, 1.0)
        row_sum = (sps_sc[...] - diag) - num_pos * inv_temp - num_pos * jnp.log(safe_denom)
        loss_rows = jnp.where(valid, -row_sum / safe_np, 0.0)
        if scale_by_temperature:
            loss_rows = loss_rows * temperature
        loss_ref[...] = loss_rows
        valid_ref[...] = valid.astype(jnp.float32)


def _choose_block(B, D, itemsize, block=None):
    """Pick a square tile size (multiple of 128) and the padded batch size."""
    min_pad = _round_up(max(B, 1), 128)
    if block is not None:
        blk = max(128, _round_up(int(block), 128))
        blk = min(blk, min_pad)
        return blk, _round_up(B, blk)

    budget = 20 << 20   # fits under the 32 MiB scoped-VMEM default with headroom
    candidates = []
    for c in (1024, 512, 256, 128):
        need = 4 * c * D * itemsize + 6 * c * c * 4   # dbl-buffered feature tiles + f32 temps
        if need <= budget or c == 128:
            candidates.append(c)

    blk = 128
    for c in candidates:                  # descending; bound padding waste to ~12.5%
        if _round_up(B, c) <= (min_pad * 9) // 8:
            blk = c
            break
    blk = min(blk, min_pad)
    # Keep >= 2 query tiles when the batch allows so the "parallel" axis can be
    # split across v7x's two TensorCores (harmless on v5e/v6e: 1 TC).
    if min_pad // blk < 2 and blk >= 256:
        blk //= 2
    return blk, _round_up(B, blk)


def supcon_loss(features, labels=None, mask=None, *, temperature=0.1,
                scale_by_temperature=True, block=None, compute_dtype=None):
    """JAX/Pallas forward of SupConLoss (labels / identity-mask paths).

    Returns NaN when no row has a positive pair (same as the reference's
    `.mean()` over an empty selection).
    """
    if labels is not None and mask is not None:
        raise ValueError("Cannot define both `labels` and `mask`")
    if mask is not None:
        # TODO(synk): arbitrary user-supplied [B,B] mask path is not implemented in the
        # tiled kernel (the module's labels / identity paths are covered).
        raise NotImplementedError("explicit `mask` not supported by the Pallas kernel")

    features = jnp.asarray(features)
    B, D = features.shape
    if labels is None:
        # eye mask == every sample is its own class (no positives): same semantics.
        labels = jnp.arange(B, dtype=jnp.int32)
    else:
        labels = jnp.asarray(labels).reshape(-1)
        if labels.shape[0] != B:
            raise ValueError("Num of labels does not match num of features")
        labels = labels.astype(jnp.int32)

    # L2-normalize ONCE in f32 (one XLA pass over [B,D]); the kernel only matmuls.
    f32 = features.astype(jnp.float32)
    f32 = f32 * jax.lax.rsqrt(jnp.maximum(jnp.sum(f32 * f32, axis=1, keepdims=True), 1e-24))
    cdt = jnp.dtype(compute_dtype) if compute_dtype is not None else jnp.dtype(features.dtype)
    fnorm = f32.astype(cdt)

    blk, Bp = _choose_block(B, D, cdt.itemsize, block)
    pad = Bp - B
    padded = pad > 0
    if padded:
        fnorm = jnp.pad(fnorm, ((0, pad), (0, 0)))
        labels = jnp.pad(labels, (0, pad), constant_values=_LABEL_SENTINEL)
    qlab = labels.reshape(Bp, 1)
    klab = labels.reshape(1, Bp)
    colmask = (jnp.arange(Bp, dtype=jnp.int32) < B).astype(jnp.float32).reshape(1, Bp)

    nq = Bp // blk
    grid = (nq, nq)

    kernel = functools.partial(
        _supcon_kernel,
        inv_temp=1.0 / float(temperature),
        temperature=float(temperature),
        scale_by_temperature=bool(scale_by_temperature),
        padded=padded, blk=blk)

    grid_spec = pltpu.PrefetchScalarGridSpec(
        num_scalar_prefetch=0,
        grid=grid,
        in_specs=[
            pl.BlockSpec((blk, D), lambda qi, ki: (qi, 0)),   # query feature tile
            pl.BlockSpec((blk, D), lambda qi, ki: (ki, 0)),   # key feature tile
            pl.BlockSpec((blk, 1), lambda qi, ki: (qi, 0)),   # query labels (column)
            pl.BlockSpec((1, blk), lambda qi, ki: (0, ki)),   # key labels (row)
            pl.BlockSpec((1, blk), lambda qi, ki: (0, ki)),   # key-column validity (row)
        ],
        out_specs=[
            pl.BlockSpec((blk, 1), lambda qi, ki: (qi, 0)),   # per-row loss
            pl.BlockSpec((blk, 1), lambda qi, ki: (qi, 0)),   # per-row validity
        ],
        scratch_shapes=[pltpu.VMEM((blk, 1), jnp.float32)] * 4,
    )

    # Raise the scoped-VMEM limit only when the tiles actually need it.  40 MiB
    # is safe on every generation (v7x: 64 MiB physical; v5e/v6e: 128 MiB).
    est_vmem = 4 * blk * D * cdt.itemsize + 6 * blk * blk * 4
    cp_kwargs = dict(dimension_semantics=("parallel", "arbitrary"))
    if est_vmem > (12 << 20):
        cp_kwargs["vmem_limit_bytes"] = 40 << 20

    loss_rows, valid_rows = pl.pallas_call(
        kernel,
        out_shape=(jax.ShapeDtypeStruct((Bp, 1), jnp.float32),
                   jax.ShapeDtypeStruct((Bp, 1), jnp.float32)),
        grid_spec=grid_spec,
        compiler_params=pltpu.CompilerParams(**cp_kwargs),
    )(fnorm, fnorm, qlab, klab, colmask)

    # Padded rows are simply dropped; the tiny final reduction stays in XLA so
    # the query-tile grid axis can remain "parallel".
    loss_rows = loss_rows[:B, 0]
    valid_rows = valid_rows[:B, 0]
    return jnp.sum(loss_rows) / jnp.sum(valid_rows)


def _reference_supcon(features, labels, temperature=0.1, scale_by_temperature=True):
    # Pure-JAX reference mirroring the PyTorch module.
    f = features.astype(jnp.float32)
    f = f / jnp.linalg.norm(f, axis=1, keepdims=True)
    B = f.shape[0]
    mask = (labels.reshape(-1, 1) == labels.reshape(1, -1)).astype(jnp.float32)
    sim = (f @ f.T) / temperature
    logits = sim - jnp.max(sim, axis=1, keepdims=True)
    exp_logits = jnp.exp(logits)
    eye = jnp.eye(B, dtype=jnp.float32)
    pos = mask * (1.0 - eye)
    neg = 1.0 - mask
    num_pos = jnp.sum(pos, axis=1)
    denom = (jnp.sum(exp_logits * neg, axis=1, keepdims=True)
             + jnp.sum(exp_logits * pos, axis=1, keepdims=True))
    log_probs = logits - jnp.log(denom)
    row_sum = jnp.sum(log_probs * pos, axis=1)
    valid = num_pos > 0
    per_row = jnp.where(valid, row_sum / jnp.where(valid, num_pos, 1.0), 0.0)
    loss_rows = -per_row * (temperature if scale_by_temperature else 1.0)
    return jnp.sum(jnp.where(valid, loss_rows, 0.0)) / jnp.sum(valid.astype(jnp.float32))


if __name__ == "__main__":
    key = jax.random.PRNGKey(0)
    k1, k2, k3, k4, k5, k6, k7, k8 = jax.random.split(key, 8)

    # 1) Small primary check: batch=8, hidden=32 (padded to one 128x128 tile).
    B, D = 8, 32
    feats = jax.random.normal(k1, (B, D), dtype=jnp.float32)
    labels = jax.random.randint(k2, (B,), 0, 3)
    loss = jax.block_until_ready(supcon_loss(feats, labels=labels,
                                             temperature=0.1, scale_by_temperature=True))
    ref = _reference_supcon(feats, labels)
    assert jnp.allclose(loss, ref, atol=1e-3, rtol=1e-3), (loss, ref)

    # 2) Multi-tile, unpadded: B=256 -> blk=128, grid (2, 2); exercises the
    #    key-tile reduction, the diagonal-tile capture and the parallel axis.
    B2, D2 = 256, 32
    feats2 = jax.random.normal(k3, (B2, D2), dtype=jnp.float32)
    labels2 = jax.random.randint(k4, (B2,), 0, 8)
    loss2 = jax.block_until_ready(supcon_loss(feats2, labels=labels2))
    ref2 = _reference_supcon(feats2, labels2)
    assert jnp.allclose(loss2, ref2, atol=1e-3, rtol=1e-3), (loss2, ref2)

    # 3) Padded single-tile: B=12 padded to 128; padded rows/cols masked exactly.
    B3 = 12
    feats3 = jax.random.normal(k5, (B3, D), dtype=jnp.float32)
    labels3 = jax.random.randint(k6, (B3,), 0, 3)
    loss3 = jax.block_until_ready(supcon_loss(feats3, labels=labels3))
    ref3 = _reference_supcon(feats3, labels3)
    assert jnp.allclose(loss3, ref3, atol=1e-3, rtol=1e-3), (loss3, ref3)

    # 4) Padded multi-tile: B=200 padded to 256, blk=128, grid (2, 2).
    B4 = 200
    feats4 = jax.random.normal(k7, (B4, D), dtype=jnp.float32)
    labels4 = jax.random.randint(k8, (B4,), 0, 5)
    loss4 = jax.block_until_ready(supcon_loss(feats4, labels=labels4))
    ref4 = _reference_supcon(feats4, labels4)
    assert jnp.allclose(loss4, ref4, atol=1e-3, rtol=1e-3), (loss4, ref4)

    print("KERNEL_OK")
</pallas_src>

<mosaic_0001>
module attributes {stable_mosaic.version = 11 : i64} {
  func.func @_supcon_kernel(%arg0: i32, %arg1: i32, %arg2: memref<128x32xf32, #tpu.memory_space<vmem>>, %arg3: memref<128x32xf32, #tpu.memory_space<vmem>>, %arg4: memref<128x1xi32, #tpu.memory_space<vmem>>, %arg5: memref<1x128xi32, #tpu.memory_space<vmem>>, %arg6: memref<1x128xf32, #tpu.memory_space<vmem>>, %arg7: memref<128x1xf32, #tpu.memory_space<vmem>>, %arg8: memref<128x1xf32, #tpu.memory_space<vmem>>, %arg9: memref<128x1xf32, #tpu.memory_space<vmem>>, %arg10: memref<128x1xf32, #tpu.memory_space<vmem>>, %arg11: memref<128x1xf32, #tpu.memory_space<vmem>>, %arg12: memref<128x1xf32, #tpu.memory_space<vmem>>) attributes {dimension_semantics = [#tpu.dimension_semantics<parallel>, #tpu.dimension_semantics<arbitrary>], iteration_bounds = array<i64: 1, 1>, scalar_prefetch = 0 : i64, scratch_operands = 4 : i64, tpu.core_type = #tpu.core_type<tc>, window_params = [{transform_indices = @transform_0, window_bounds = array<i64: 128, 32>}, {transform_indices = @transform_1, window_bounds = array<i64: 128, 32>}, {transform_indices = @transform_2, window_bounds = array<i64: 128, 1>}, {transform_indices = @transform_3, window_bounds = array<i64: 1, 128>}, {transform_indices = @transform_4, window_bounds = array<i64: 1, 128>}, {transform_indices = @transform_5, window_bounds = array<i64: 128, 1>}, {transform_indices = @transform_6, window_bounds = array<i64: 128, 1>}]} {
    %c0_i32 = arith.constant 0 : i32
    %0 = arith.cmpi eq, %arg1, %c0_i32 : i32
    %1 = arith.extui %0 : i1 to i32
    %c0_i32_0 = arith.constant 0 : i32
    %2 = arith.cmpi ne, %1, %c0_i32_0 : i32
    scf.if %2 {
      %cst_30 = arith.constant 0.000000e+00 : f32
      %43 = vector.broadcast %cst_30 : f32 to vector<128x1xf32>
      %c0_31 = arith.constant 0 : index
      %c0_32 = arith.constant 0 : index
      %44 = vector.load %arg9[%c0_31, %c0_32] : memref<128x1xf32, #tpu.memory_space<vmem>>, vector<128x1xf32>
      tpu.vector_store %arg9[%c0_31, %c0_32], %43 {strides = array<i32>} : memref<128x1xf32, #tpu.memory_space<vmem>>, vector<128x1xf32>,
      %cst_33 = arith.constant 0.000000e+00 : f32
      %45 = vector.broadcast %cst_33 : f32 to vector<128x1xf32>
      %c0_34 = arith.constant 0 : index
      %c0_35 = arith.constant 0 : index
      %46 = vector.load %arg10[%c0_34, %c0_35] : memref<128x1xf32, #tpu.memory_space<vmem>>, vector<128x1xf32>
      tpu.vector_store %arg10[%c0_34, %c0_35], %45 {strides = array<i32>} : memref<128x1xf32, #tpu.memory_space<vmem>>, vector<128x1xf32>,
      %cst_36 = arith.constant 0.000000e+00 : f32
      %47 = vector.broadcast %cst_36 : f32 to vector<128x1xf32>
      %c0_37 = arith.constant 0 : index
      %c0_38 = arith.constant 0 : index
      %48 = vector.load %arg11[%c0_37, %c0_38] : memref<128x1xf32, #tpu.memory_space<vmem>>, vector<128x1xf32>
      tpu.vector_store %arg11[%c0_37, %c0_38], %47 {strides = array<i32>} : memref<128x1xf32, #tpu.memory_space<vmem>>, vector<128x1xf32>,
      %cst_39 = arith.constant 1.000000e+01 : f32
      %49 = vector.broadcast %cst_39 : f32 to vector<128x1xf32>
      %c0_40 = arith.constant 0 : index
      %c0_41 = arith.constant 0 : index
      %50 = vector.load %arg12[%c0_40, %c0_41] : memref<128x1xf32, #tpu.memory_space<vmem>>, vector<128x1xf32>
      tpu.vector_store %arg12[%c0_40, %c0_41], %49 {strides = array<i32>} : memref<128x1xf32, #tpu.memory_space<vmem>>, vector<128x1xf32>,
    } else {
    }
    %c0 = arith.constant 0 : index
    %c0_1 = arith.constant 0 : index
    %3 = vector.load %arg2[%c0, %c0_1] : memref<128x32xf32, #tpu.memory_space<vmem>>, vector<128x32xf32>
    %c0_2 = arith.constant 0 : index
    %c0_3 = arith.constant 0 : index
    %4 = vector.load %arg3[%c0_2, %c0_3] : memref<128x32xf32, #tpu.memory_space<vmem>>, vector<128x32xf32>
    %cst = arith.constant dense<0.000000e+00> : vector<128x128xf32>
    %5 = tpu.matmul %3, %4, %cst {dimension_numbers = #tpu.dot_dimension_numbers<[1], [1], [0], [0], [0, 0, 1, 0], [], []>} : vector<128x32xf32>, vector<128x32xf32>, vector<128x128xf32> -> vector<128x128xf32>
    %cst_4 = arith.constant 1.000000e+01 : f32
    %6 = vector.broadcast %cst_4 : f32 to vector<128x128xf32>
    %7 = arith.mulf %5, %6 : vector<128x128xf32>
    %c0_5 = arith.constant 0 : index
    %c0_6 = arith.constant 0 : index
    %8 = vector.load %arg4[%c0_5, %c0_6] : memref<128x1xi32, #tpu.memory_space<vmem>>, vector<128x1xi32>
    %c0_7 = arith.constant 0 : index
    %c0_8 = arith.constant 0 : index
    %9 = vector.load %arg5[%c0_7, %c0_8] : memref<1x128xi32, #tpu.memory_space<vmem>>, vector<1x128xi32>
    %10 = vector.broadcast %8 : vector<128x1xi32> to vector<128x128xi32>
    %11 = vector.broadcast %9 : vector<1x128xi32> to vector<128x128xi32>
    %12 = arith.cmpi eq, %10, %11 : vector<128x128xi32>
    %13 = arith.extui %12 : vector<128x128xi1> to vector<128x128xi32>
    %14 = arith.sitofp %13 : vector<128x128xi32> to vector<128x128xf32>
    %cst_9 = arith.constant 1.000000e+01 : f32
    %15 = vector.broadcast %cst_9 : f32 to vector<128x128xf32>
    %16 = arith.subf %7, %15 : vector<128x128xf32>
    %17 = math.exp %16 : vector<128x128xf32>
    %c0_10 = arith.constant 0 : index
    %c0_11 = arith.constant 0 : index
    %18 = vector.load %arg6[%c0_10, %c0_11] : memref<1x128xf32, #tpu.memory_space<vmem>>, vector<1x128xf32>
    %19 = vector.broadcast %18 : vector<1x128xf32> to vector<128x128xf32>
    %20 = arith.mulf %17, %19 : vector<128x128xf32>
    %c0_12 = arith.constant 0 : index
    %c0_13 = arith.constant 0 : index
    %21 = vector.load %arg9[%c0_12, %c0_13] : memref<128x1xf32, #tpu.memory_space<vmem>>, vector<128x1xf32>
    %cst_14 = arith.constant dense<0.000000e+00> : vector<128xf32>
    %22 = vector.multi_reduction <add>, %20, %cst_14 [1] : vector<128x128xf32> to vector<128xf32>
    %23 = vector.shape_cast %22 : vector<128xf32> to vector<128x1xf32>
    %24 = arith.addf %21, %23 : vector<128x1xf32>
    %c0_15 = arith.constant 0 : index
    %c0_16 = arith.constant 0 : index
    %25 = vector.load %arg9[%c0_15, %c0_16] : memref<128x1xf32, #tpu.memory_space<vmem>>, vector<128x1xf32>
    tpu.vector_store %arg9[%c0_15, %c0_16], %24 {strides = array<i32>} : memref<128x1xf32, #tpu.memory_space<vmem>>, vector<128x1xf32>,
    %c0_17 = arith.constant 0 : index
    %c0_18 = arith.constant 0 : index
    %26 = vector.load %arg10[%c0_17, %c0_18] : memref<128x1xf32, #tpu.memory_space<vmem>>, vector<128x1xf32>
    %27 = arith.mulf %7, %14 : vector<128x128xf32>
    %cst_19 = arith.constant dense<0.000000e+00> : vector<128xf32>
    %28 = vector.multi_reduction <add>, %27, %cst_19 [1] : vector<128x128xf32> to vector<128xf32>
    %29 = vector.shape_cast %28 : vector<128xf32> to vector<128x1xf32>
    %30 = arith.addf %26, %29 : vector<128x1xf32>
    %c0_20 = arith.constant 0 : index
    %c0_21 = arith.constant 0 : index
    %31 = vector.load %arg10[%c0_20, %c0_21] : memref<128x1xf32, #tpu.memory_space<vmem>>, vector<128x1xf32>
    tpu.vector_store %arg10[%c0_20, %c0_21], %30 {strides = array<i32>} : memref<128x1xf32, #tpu.memory_space<vmem>>, vector<128x1xf32>,
    %c0_22 = arith.constant 0 : index
    %c0_23 = arith.constant 0 : index
    %32 = vector.load %arg11[%c0_22, %c0_23] : memref<128x1xf32, #tpu.memory_space<vmem>>, vector<128x1xf32>
    %cst_24 = arith.constant dense<0.000000e+00> : vector<128xf32>
    %33 = vector.multi_reduction <add>, %14, %cst_24 [1] : vector<128x128xf32> to vector<128xf32>
    %34 = vector.shape_cast %33 : vector<128xf32> to vector<128x1xf32>
    %35 = arith.addf %32, %34 : vector<128x1xf32>
    %c0_25 = arith.constant 0 : index
    %c0_26 = arith.constant 0 : index
    %36 = vector.load %arg11[%c0_25, %c0_26] : memref<128x1xf32, #tpu.memory_space<vmem>>, vector<128x1xf32>
    tpu.vector_store %arg11[%c0_25, %c0_26], %35 {strides = array<i32>} : memref<128x1xf32, #tpu.memory_space<vmem>>, vector<128x1xf32>,
    %37 = arith.cmpi eq, %arg0, %arg1 : i32
    %38 = arith.extui %37 : i1 to i32
    %c0_i32_27 = arith.constant 0 : i32
    %39 = arith.cmpi ne, %38, %c0_i32_27 : i32
    scf.if %39 {
      %43 = tpu.iota {dimensions = array<i32: 0>} : vector<128x128xi32>
      %44 = tpu.iota {dimensions = array<i32: 1>} : vector<128x128xi32>
      %45 = arith.cmpi eq, %43, %44 : vector<128x128xi32>
      %cst_30 = arith.constant 0.000000e+00 : f32
      %46 = vector.broadcast %cst_30 : f32 to vector<128x128xf32>
      %47 = arith.select %45, %7, %46 : vector<128x128xi1>, vector<128x128xf32>
      %cst_31 = arith.constant dense<0.000000e+00> : vector<128xf32>
      %48 = vector.multi_reduction <add>, %47, %cst_31 [1] : vector<128x128xf32> to vector<128xf32>
      %49 = vector.shape_cast %48 : vector<128xf32> to vector<128x1xf32>
      %c0_32 = arith.constant 0 : index
      %c0_33 = arith.constant 0 : index
      %50 = vector.load %arg12[%c0_32, %c0_33] : memref<128x1xf32, #tpu.memory_space<vmem>>, vector<128x1xf32>
      tpu.vector_store %arg12[%c0_32, %c0_33], %49 {strides = array<i32>} : memref<128x1xf32, #tpu.memory_space<vmem>>, vector<128x1xf32>,
    } else {
    }
    %c0_i32_28 = arith.constant 0 : i32
    %40 = arith.cmpi eq, %arg1, %c0_i32_28 : i32
    %41 = arith.extui %40 : i1 to i32
    %c0_i32_29 = arith.constant 0 : i32
    %42 = arith.cmpi ne, %41, %c0_i32_29 : i32
    scf.if %42 {
      %c0_30 = arith.constant 0 : index
      %c0_31 = arith.constant 0 : index
      %43 = vector.load %arg12[%c0_30, %c0_31] : memref<128x1xf32, #tpu.memory_space<vmem>>, vector<128x1xf32>
      %c0_32 = arith.constant 0 : index
      %c0_33 = arith.constant 0 : index
      %44 = vector.load %arg9[%c0_32, %c0_33] : memref<128x1xf32, #tpu.memory_space<vmem>>, vector<128x1xf32>
      %cst_34 = arith.constant 1.000000e+01 : f32
      %45 = vector.broadcast %cst_34 : f32 to vector<128x1xf32>
      %46 = arith.subf %43, %45 : vector<128x1xf32>
      %47 = math.exp %46 : vector<128x1xf32>
      %48 = arith.subf %44, %47 : vector<128x1xf32>
      %c0_35 = arith.constant 0 : index
      %c0_36 = arith.constant 0 : index
      %49 = vector.load %arg11[%c0_35, %c0_36] : memref<128x1xf32, #tpu.memory_space<vmem>>, vector<128x1xf32>
      %cst_37 = arith.constant 1.000000e+00 : f32
      %50 = vector.broadcast %cst_37 : f32 to vector<128x1xf32>
      %51 = arith.subf %49, %50 : vector<128x1xf32>
      %cst_38 = arith.constant 0.000000e+00 : f32
      %52 = vector.broadcast %cst_38 : f32 to vector<128x1xf32>
      %53 = arith.cmpf ogt, %51, %52 : vector<128x1xf32>
      %cst_39 = arith.constant 1.000000e+00 : f32
      %54 = vector.broadcast %cst_39 : f32 to vector<128x1xf32>
      %55 = arith.select %53, %51, %54 : vector<128x1xi1>, vector<128x1xf32>
      %cst_40 = arith.constant 0.000000e+00 : f32
      %56 = vector.broadcast %cst_40 : f32 to vector<128x1xf32>
      %57 = arith.cmpf ogt, %48, %56 : vector<128x1xf32>
      %cst_41 = arith.constant 1.000000e+00 : f32
      %58 = vector.broadcast %cst_41 : f32 to vector<128x1xf32>
      %59 = arith.select %57, %48, %58 : vector<128x1xi1>, vector<128x1xf32>
      %c0_42 = arith.constant 0 : index
      %c0_43 = arith.constant 0 : index
      %60 = vector.load %arg10[%c0_42, %c0_43] : memref<128x1xf32, #tpu.memory_space<vmem>>, vector<128x1xf32>
      %61 = arith.subf %60, %43 : vector<128x1xf32>
      %cst_44 = arith.constant 1.000000e+01 : f32
      %62 = vector.broadcast %cst_44 : f32 to vector<128x1xf32>
      %63 = arith.mulf %51, %62 : vector<128x1xf32>
      %64 = arith.subf %61, %63 : vector<128x1xf32>
      %65 = math.log %59 : vector<128x1xf32>
      %66 = arith.mulf %51, %65 : vector<128x1xf32>
      %67 = arith.subf %64, %66 : vector<128x1xf32>
      %cst_45 = arith.constant 0.000000e+00 : f32
      %68 = vector.broadcast %cst_45 : f32 to vector<128x1xf32>
      %69 = arith.subf %68, %67 : vector<128x1xf32>
      %70 = arith.divf %69, %55 : vector<128x1xf32>
      %cst_46 = arith.constant 0.000000e+00 : f32
      %71 = vector.broadcast %cst_46 : f32 to vector<128x1xf32>
      %72 = arith.select %53, %70, %71 : vector<128x1xi1>, vector<128x1xf32>
      %cst_47 = arith.constant 1.000000e-01 : f32
      %73 = vector.broadcast %cst_47 : f32 to vector<128x1xf32>
      %74 = arith.mulf %72, %73 : vector<128x1xf32>
      %c0_48 = arith.constant 0 : index
      %c0_49 = arith.constant 0 : index
      %75 = vector.load %arg7[%c0_48, %c0_49] : memref<128x1xf32, #tpu.memory_space<vmem>>, vector<128x1xf32>
      tpu.vector_store %arg7[%c0_48, %c0_49], %74 {strides = array<i32>} : memref<128x1xf32, #tpu.memory_space<vmem>>, vector<128x1xf32>,
      %76 = arith.extui %53 : vector<128x1xi1> to vector<128x1xi32>
      %77 = arith.sitofp %76 : vector<128x1xi32> to vector<128x1xf32>
      %c0_50 = arith.constant 0 : index
      %c0_51 = arith.constant 0 : index
      %78 = vector.load %arg8[%c0_50, %c0_51] : memref<128x1xf32, #tpu.memory_space<vmem>>, vector<128x1xf32>
      tpu.vector_store %arg8[%c0_50, %c0_51], %77 {strides = array<i32>} : memref<128x1xf32, #tpu.memory_space<vmem>>, vector<128x1xf32>,
    } else {
    }
    return
  }
  func.func @transform_0(%arg0: i32, %arg1: i32) -> (i32, i32) {
    %c0_i32 = arith.constant 0 : i32
    %c0_i32_0 = arith.constant 0 : i32
    return %arg0, %c0_i32 : i32, i32
  }
  func.func @transform_1(%arg0: i32, %arg1: i32) -> (i32, i32) {
    %c0_i32 = arith.constant 0 : i32
    %c0_i32_0 = arith.constant 0 : i32
    return %arg1, %c0_i32 : i32, i32
  }
  func.func @transform_2(%arg0: i32, %arg1: i32) -> (i32, i32) {
    %c0_i32 = arith.constant 0 : i32
    %c0_i32_0 = arith.constant 0 : i32
    return %arg0, %c0_i32 : i32, i32
  }
  func.func @transform_3(%arg0: i32, %arg1: i32) -> (i32, i32) {
    %c0_i32 = arith.constant 0 : i32
    %c0_i32_0 = arith.constant 0 : i32
    return %c0_i32, %arg1 : i32, i32
  }
  func.func @transform_4(%arg0: i32, %arg1: i32) -> (i32, i32) {
    %c0_i32 = arith.constant 0 : i32
    %c0_i32_0 = arith.constant 0 : i32
    return %c0_i32, %arg1 : i32, i32
  }
  func.func @transform_5(%arg0: i32, %arg1: i32) -> (i32, i32) {
    %c0_i32 = arith.constant 0 : i32
    %c0_i32_0 = arith.constant 0 : i32
    return %arg0, %c0_i32 : i32, i32
  }
  func.func @transform_6(%arg0: i32, %arg1: i32) -> (i32, i32) {
    %c0_i32 = arith.constant 0 : i32
    %c0_i32_0 = arith.constant 0 : i32
    return %arg0, %c0_i32 : i32, i32
  }
}

</mosaic_0001>

<llo_original>
// kernel: tpu_custom_call.1
$region0: #{tpu_custom_call.1}
  #allocation0 [shape = 'u32[]', space=smem, size = 0x4, offset = 0x4, fixed_abs, tag = 'smem constant byte address 0x4 - core index']
  #allocation1 [shape = 'u32[144,128]{1,0:T(1,128)}', space=vmem, size = 0x12000, scoped, tag = 'internal scratch']
  #allocation2 [shape = 'f32[128,1]{1,0:T(8,128)}', space=vmem, size = 0x10000, scoped, tag = 'scratch operand']
  #allocation3 [shape = 'f32[128,1]{1,0:T(8,128)}', space=vmem, size = 0x10000, scoped, tag = 'scratch operand']
  #allocation4 [shape = 'f32[128,1]{1,0:T(8,128)}', space=vmem, size = 0x10000, scoped, tag = 'scratch operand']
  #allocation5 [shape = 'f32[128,1]{1,0:T(8,128)}', space=vmem, size = 0x10000, scoped, tag = 'scratch operand']
  %s0 = inlined_call_operand.vmem [shape: f32[128,32], index: 0, kind: input, shape index: {}]
  %s1 = inlined_call_operand.vmem [shape: f32[128,32], index: 1, kind: input, shape index: {}]
  %s2 = inlined_call_operand.vmem [shape: s32[128,1], index: 2, kind: input, shape index: {}]
  %s3 = inlined_call_operand.vmem [shape: s32[1,128], index: 3, kind: input, shape index: {}]
  %s4 = inlined_call_operand.vmem [shape: f32[1,128], index: 4, kind: input, shape index: {}]
  %s5 = inlined_call_operand.vmem [shape: f32[128,1], index: 5, kind: output, shape index: {0}]
  %s6 = inlined_call_operand.vmem [shape: f32[128,1], index: 6, kind: output, shape index: {1}]
  %7 = xla_tuple %s5, %s6
  %s8 = sld [smem:[#allocation0]]
  $region50: #{tpu_custom_call.1} parent=0
    _
  %s10 = ssub.s32 1, %s8
  %s11 = scalar_select 0, %s10, %s8
  // Predicated region
  $region2: #{tpu_custom_call.1} parent=0 // pred_check
    _
  $region3: #{tpu_custom_call.1} parent=0 // pred_check_branch
    %13 = sbr.rel (0) target = $region5
  $region4: #{tpu_custom_call.1} parent=0 // pred_region
    _
  $region5: #{tpu_custom_call.1} parent=0 // pred_fallthru
    _
  // Predicated region
  $region6: #{tpu_custom_call.1} parent=0 // pred_check
    _
  $region7: #{tpu_custom_call.1} parent=0 // pred_check_branch
    %15 = sbr.rel (0) target = $region9
  $region8: #{tpu_custom_call.1} parent=0 // pred_region
    _
  $region9: #{tpu_custom_call.1} parent=0 // pred_fallthru
    _
  // Predicated region
  $region10: #{tpu_custom_call.1} parent=0 // pred_check
    _
  $region11: #{tpu_custom_call.1} parent=0 // pred_check_branch
    %17 = sbr.rel (0) target = $region13
  $region12: #{tpu_custom_call.1} parent=0 // pred_region
    _
  $region13: #{tpu_custom_call.1} parent=0 // pred_fallthru
    _
  // Predicated region
  $region14: #{tpu_custom_call.1} parent=0 // pred_check
    _
  $region15: #{tpu_custom_call.1} parent=0 // pred_check_branch
    %19 = sbr.rel (0) target = $region17
  $region16: #{tpu_custom_call.1} parent=0 // pred_region
    _
  $region17: #{tpu_custom_call.1} parent=0 // pred_fallthru
    _
  // Predicated region
  $region18: #{tpu_custom_call.1} parent=0 // pred_check
    _
  $region19: #{tpu_custom_call.1} parent=0 // pred_check_branch
    %21 = sbr.rel (0) target = $region21
  $region20: #{tpu_custom_call.1} parent=0 // pred_region
    _
  $region21: #{tpu_custom_call.1} parent=0 // pred_fallthru
    _
  %p22 = scmp.eq.s32.totalorder 0, 0
  // Predicated region
  $region22: #{tpu_custom_call.1} parent=0 // pred_check
    %p23 = pneg %p22
  $region23: #{tpu_custom_call.1} parent=0 // pred_check_branch
    %25 = sbr.rel (%p23) target = $region25
  $region24: #{tpu_custom_call.1} parent=0 // pred_region
    %vm26 = vcmask 7168
    %27 = vst.msk [vmem:[#allocation2] sm:$0xff] %vm26, 0.0
    %28 = vst.msk [vmem:[#allocation2 + $0x8] sm:$0xff] %vm26, 0.0
    %29 = vst.msk [vmem:[#allocation2 + $0x10] sm:$0xff] %vm26, 0.0
    %30 = vst.msk [vmem:[#allocation2 + $0x18] sm:$0xff] %vm26, 0.0
    %31 = vst.msk [vmem:[#allocation2 + $0x20] sm:$0xff] %vm26, 0.0
    %32 = vst.msk [vmem:[#allocation2 + $0x28] sm:$0xff] %vm26, 0.0
    %33 = vst.msk [vmem:[#allocation2 + $0x30] sm:$0xff] %vm26, 0.0
    %34 = vst.msk [vmem:[#allocation2 + $0x38] sm:$0xff] %vm26, 0.0
    %35 = vst.msk [vmem:[#allocation2 + $0x40] sm:$0xff] %vm26, 0.0
    %36 = vst.msk [vmem:[#allocation2 + $0x48] sm:$0xff] %vm26, 0.0
    %37 = vst.msk [vmem:[#allocation2 + $0x50] sm:$0xff] %vm26, 0.0
    %38 = vst.msk [vmem:[#allocation2 + $0x58] sm:$0xff] %vm26, 0.0
    %39 = vst.msk [vmem:[#allocation2 + $0x60] sm:$0xff] %vm26, 0.0
    %40 = vst.msk [vmem:[#allocation2 + $0x68] sm:$0xff] %vm26, 0.0
    %41 = vst.msk [vmem:[#allocation2 + $0x70] sm:$0xff] %vm26, 0.0
    %42 = vst.msk [vmem:[#allocation2 + $0x78] sm:$0xff] %vm26, 0.0
    %43 = vst.msk [vmem:[#allocation3] sm:$0xff] %vm26, 0.0
    %44 = vst.msk [vmem:[#allocation3 + $0x8] sm:$0xff] %vm26, 0.0
    %45 = vst.msk [vmem:[#allocation3 + $0x10] sm:$0xff] %vm26, 0.0
    %46 = vst.msk [vmem:[#allocation3 + $0x18] sm:$0xff] %vm26, 0.0
    %47 = vst.msk [vmem:[#allocation3 + $0x20] sm:$0xff] %vm26, 0.0
    %48 = vst.msk [vmem:[#allocation3 + $0x28] sm:$0xff] %vm26, 0.0
    %49 = vst.msk [vmem:[#allocation3 + $0x30] sm:$0xff] %vm26, 0.0
    %50 = vst.msk [vmem:[#allocation3 + $0x38] sm:$0xff] %vm26, 0.0
    %51 = vst.msk [vmem:[#allocation3 + $0x40] sm:$0xff] %vm26, 0.0
    %52 = vst.msk [vmem:[#allocation3 + $0x48] sm:$0xff] %vm26, 0.0
    %53 = vst.msk [vmem:[#allocation3 + $0x50] sm:$0xff] %vm26, 0.0
    %54 = vst.msk [vmem:[#allocation3 + $0x58] sm:$0xff] %vm26, 0.0
    %55 = vst.msk [vmem:[#allocation3 + $0x60] sm:$0xff] %vm26, 0.0
    %56 = vst.msk [vmem:[#allocation3 + $0x68] sm:$0xff] %vm26, 0.0
    %57 = vst.msk [vmem:[#allocation3 + $0x70] sm:$0xff] %vm26, 0.0
    %58 = vst.msk [vmem:[#allocation3 + $0x78] sm:$0xff] %vm26, 0.0
    %59 = vst.msk [vmem:[#allocation4] sm:$0xff] %vm26, 0.0
    %60 = vst.msk [vmem:[#allocation4 + $0x8] sm:$0xff] %vm26, 0.0
    %61 = vst.msk [vmem:[#allocation4 + $0x10] sm:$0xff] %vm26, 0.0
    %62 = vst.msk [vmem:[#allocation4 + $0x18] sm:$0xff] %vm26, 0.0
    %63 = vst.msk [vmem:[#allocation4 + $0x20] sm:$0xff] %vm26, 0.0
    %64 = vst.msk [vmem:[#allocation4 + $0x28] sm:$0xff] %vm26, 0.0
    %65 = vst.msk [vmem:[#allocation4 + $0x30] sm:$0xff] %vm26, 0.0
    %66 = vst.msk [vmem:[#allocation4 + $0x38] sm:$0xff] %vm26, 0.0
    %67 = vst.msk [vmem:[#allocation4 + $0x40] sm:$0xff] %vm26, 0.0
    %68 = vst.msk [vmem:[#allocation4 + $0x48] sm:$0xff] %vm26, 0.0
    %69 = vst.msk [vmem:[#allocation4 + $0x50] sm:$0xff] %vm26, 0.0
    %70 = vst.msk [vmem:[#allocation4 + $0x58] sm:$0xff] %vm26, 0.0
    %71 = vst.msk [vmem:[#allocation4 + $0x60] sm:$0xff] %vm26, 0.0
    %72 = vst.msk [vmem:[#allocation4 + $0x68] sm:$0xff] %vm26, 0.0
    %73 = vst.msk [vmem:[#allocation4 + $0x70] sm:$0xff] %vm26, 0.0
    %74 = vst.msk [vmem:[#allocation4 + $0x78] sm:$0xff] %vm26, 0.0
    %75 = vst.msk [vmem:[#allocation5] sm:$0xff] %vm26, 10.0
    %76 = vst.msk [vmem:[#allocation5 + $0x8] sm:$0xff] %vm26, 10.0
    %77 = vst.msk [vmem:[#allocation5 + $0x10] sm:$0xff] %vm26, 10.0
    %78 = vst.msk [vmem:[#allocation5 + $0x18] sm:$0xff] %vm26, 10.0
    %79 = vst.msk [vmem:[#allocation5 + $0x20] sm:$0xff] %vm26, 10.0
    %80 = vst.msk [vmem:[#allocation5 + $0x28] sm:$0xff] %vm26, 10.0
    %81 = vst.msk [vmem:[#allocation5 + $0x30] sm:$0xff] %vm26, 10.0
    %82 = vst.msk [vmem:[#allocation5 + $0x38] sm:$0xff] %vm26, 10.0
    %83 = vst.msk [vmem:[#allocation5 + $0x40] sm:$0xff] %vm26, 10.0
    %84 = vst.msk [vmem:[#allocation5 + $0x48] sm:$0xff] %vm26, 10.0
    %85 = vst.msk [vmem:[#allocation5 + $0x50] sm:$0xff] %vm26, 10.0
    %86 = vst.msk [vmem:[#allocation5 + $0x58] sm:$0xff] %vm26, 10.0
    %87 = vst.msk [vmem:[#allocation5 + $0x60] sm:$0xff] %vm26, 10.0
    %88 = vst.msk [vmem:[#allocation5 + $0x68] sm:$0xff] %vm26, 10.0
    %89 = vst.msk [vmem:[#allocation5 + $0x70] sm:$0xff] %vm26, 10.0
    %90 = vst.msk [vmem:[#allocation5 + $0x78] sm:$0xff] %vm26, 10.0
  $region25: #{tpu_custom_call.1} parent=0 // pred_fallthru
    _
  %v91 = vld [vmem:[%s0] sm:$0xff]
  %v92 = vld [vmem:[%s0 + $0x8] sm:$0xff]
  %v93 = vld [vmem:[%s0 + $0x10] sm:$0xff]
  %v94 = vld [vmem:[%s0 + $0x18] sm:$0xff]
  %v95 = vld [vmem:[%s0 + $0x20] sm:$0xff]
  %v96 = vld [vmem:[%s0 + $0x28] sm:$0xff]
  %v97 = vld [vmem:[%s0 + $0x30] sm:$0xff]
  %v98 = vld [vmem:[%s0 + $0x38] sm:$0xff]
  %v99 = vld [vmem:[%s0 + $0x40] sm:$0xff]
  %v100 = vld [vmem:[%s0 + $0x48] sm:$0xff]
  %v101 = vld [vmem:[%s0 + $0x50] sm:$0xff]
  %v102 = vld [vmem:[%s0 + $0x58] sm:$0xff]
  %v103 = vld [vmem:[%s0 + $0x60] sm:$0xff]
  %v104 = vld [vmem:[%s0 + $0x68] sm:$0xff]
  %v105 = vld [vmem:[%s0 + $0x70] sm:$0xff]
  %v106 = vld [vmem:[%s0 + $0x78] sm:$0xff]
  %v107 = vld [vmem:[%s1] sm:$0xff]
  %v108 = vld [vmem:[%s1 + $0x8] sm:$0xff]
  %v109 = vld [vmem:[%s1 + $0x10] sm:$0xff]
  %v110 = vld [vmem:[%s1 + $0x18] sm:$0xff]
  %v111 = vld [vmem:[%s1 + $0x20] sm:$0xff]
  %v112 = vld [vmem:[%s1 + $0x28] sm:$0xff]
  %v113 = vld [vmem:[%s1 + $0x30] sm:$0xff]
  %v114 = vld [vmem:[%s1 + $0x38] sm:$0xff]
  %v115 = vld [vmem:[%s1 + $0x40] sm:$0xff]
  %v116 = vld [vmem:[%s1 + $0x48] sm:$0xff]
  %v117 = vld [vmem:[%s1 + $0x50] sm:$0xff]
  %v118 = vld [vmem:[%s1 + $0x58] sm:$0xff]
  %v119 = vld [vmem:[%s1 + $0x60] sm:$0xff]
  %v120 = vld [vmem:[%s1 + $0x68] sm:$0xff]
  %v121 = vld [vmem:[%s1 + $0x70] sm:$0xff]
  %v122 = vld [vmem:[%s1 + $0x78] sm:$0xff]
  %vm123 = vcmask 261120
  %v125 = vsel %vm123, %v91, 0
  %v128 = vsel %vm123, %v92, 0
  %v131 = vsel %vm123, %v93, 0
  %v134 = vsel %vm123, %v94, 0
  %v137 = vsel %vm123, %v95, 0
  %v140 = vsel %vm123, %v96, 0
  %v143 = vsel %vm123, %v97, 0
  %v146 = vsel %vm123, %v98, 0
  %v149 = vsel %vm123, %v99, 0
  %v152 = vsel %vm123, %v100, 0
  %v155 = vsel %vm123, %v101, 0
  %v158 = vsel %vm123, %v102, 0
  %v161 = vsel %vm123, %v103, 0
  %v164 = vsel %vm123, %v104, 0
  %v167 = vsel %vm123, %v105, 0
  %v170 = vsel %vm123, %v106, 0
  %v173 = vsel %vm123, %v107, 0
  %v176 = vsel %vm123, %v108, 0
  %v179 = vsel %vm123, %v109, 0
  %v182 = vsel %vm123, %v110, 0
  %v185 = vsel %vm123, %v111, 0
  %v188 = vsel %vm123, %v112, 0
  %v191 = vsel %vm123, %v113, 0
  %v194 = vsel %vm123, %v114, 0
  %v197 = vsel %vm123, %v115, 0
  %v200 = vsel %vm123, %v116, 0
  %v203 = vsel %vm123, %v117, 0
  %v206 = vsel %vm123, %v118, 0
  %v209 = vsel %vm123, %v119, 0
  %v212 = vsel %vm123, %v120, 0
  %v215 = vsel %vm123, %v121, 0
  %v218 = vsel %vm123, %v122, 0
  %220 = vmatprep.subr.mxu0 0.0
  %221 = vmatpush1.xpose.msra.mxu0 %v173
  %222 = vmatprep.subr.mxu0 0.0
  %223 = vmatpush1.xpose.msra.mxu0 %v176
  %224 = vmatprep.subr.mxu0 0.0
  %225 = vmatpush1.xpose.msra.mxu0 %v179
  %226 = vmatprep.subr.mxu0 0.0
  %227 = vmatpush1.xpose.msra.mxu0 %v182
  %228 = vmatprep.subr.mxu0 0.0
  %229 = vmatpush1.xpose.msra.mxu0 %v185
  %230 = vmatprep.subr.mxu0 0.0
  %231 = vmatpush1.xpose.msra.mxu0 %v188
  %232 = vmatprep.subr.mxu0 0.0
  %233 = vmatpush1.xpose.msra.mxu0 %v191
  %234 = vmatprep.subr.mxu0 0.0
  %235 = vmatpush1.xpose.msra.mxu0 %v194
  %236 = vmatprep.subr.mxu0 0.0
  %237 = vmatpush1.xpose.msra.mxu0 %v197
  %238 = vmatprep.subr.mxu0 0.0
  %239 = vmatpush1.xpose.msra.mxu0 %v200
  %240 = vmatprep.subr.mxu0 0.0
  %241 = vmatpush1.xpose.msra.mxu0 %v203
  %242 = vmatprep.subr.mxu0 0.0
  %243 = vmatpush1.xpose.msra.mxu0 %v206
  %244 = vmatprep.subr.mxu0 0.0
  %245 = vmatpush1.xpose.msra.mxu0 %v209
  %246 = vmatprep.subr.mxu0 0.0
  %247 = vmatpush1.xpose.msra.mxu0 %v212
  %248 = vmatprep.subr.mxu0 0.0
  %249 = vmatpush1.xpose.msra.mxu0 %v215
  %250 = vmatprep.subr.mxu0 0.0
  %251 = vmatpush1.xpose.msra.mxu0 %v218
  %252 = vmatprep.subr.mxu0 0.0
  %253 = vmatpush1.xpose.msra.mxu0 0.0
  %254 = vmatprep.subr.mxu0 0.0
  %255 = vmatpush1.xpose.msra.mxu0 0.0
  %256 = vmatprep.subr.mxu0 0.0
  %257 = vmatpush1.xpose.msra.mxu0 0.0
  %258 = vmatprep.subr.mxu0 0.0
  %259 = vmatpush1.xpose.msra.mxu0 0.0
  %260 = vmatprep.subr.mxu0 0.0
  %261 = vmatpush1.xpose.msra.mxu0 0.0
  %262 = vmatprep.subr.mxu0 0.0
  %263 = vmatpush1.xpose.msra.mxu0 0.0
  %264 = vmatprep.subr.mxu0 0.0
  %265 = vmatpush1.xpose.msra.mxu0 0.0
  %266 = vmatprep.subr.mxu0 0.0
  %267 = vmatpush1.xpose.msra.mxu0 0.0
  %268 = vmatprep.subr.mxu0 0.0
  %269 = vmatpush1.xpose.msra.mxu0 0.0
  %270 = vmatprep.subr.mxu0 0.0
  %271 = vmatpush1.xpose.msra.mxu0 0.0
  %272 = vmatprep.subr.mxu0 0.0
  %273 = vmatpush1.xpose.msra.mxu0 0.0
  %274 = vmatprep.subr.mxu0 0.0
  %275 = vmatpush1.xpose.msra.mxu0 0.0
  %276 = vmatprep.subr.mxu0 0.0
  %277 = vmatpush1.xpose.msra.mxu0 0.0
  %278 = vmatprep.subr.mxu0 0.0
  %279 = vmatpush1.xpose.msra.mxu0 0.0
  %280 = vmatprep.subr.mxu0 0.0
  %281 = vmatpush1.xpose.msra.mxu0 0.0
  %282 = vmatprep.subr.mxu0 0.0
  %283 = vmatpush1.xpose.msra.mxu0 0.0
  %284 = vmatprep.mubr.f32.mxu0 0.0
  %285 = vmatmul.mubr.f32.gmra.mrb[0].mxu0 %v125
  %v286 = vpop.f32.mrb[0].mxu0
  %v287 = vadd.f32 0.0, %v286
  %v288 = vpop.f32.mrb[0].mxu0
  %289 = vmatprep.mubr.f32.mxu0 0.0
  %290 = vmatmul.mubr.f32.gmra.mrb[0].mxu0 %v128
  %v291 = vpop.f32.mrb[0].mxu0
  %v292 = vadd.f32 0.0, %v291
  %v293 = vpop.f32.mrb[0].mxu0
  %294 = vmatprep.mubr.f32.mxu0 0.0
  %295 = vmatmul.mubr.f32.gmra.mrb[0].mxu0 %v131
  %v296 = vpop.f32.mrb[0].mxu0
  %v297 = vadd.f32 0.0, %v296
  %v298 = vpop.f32.mrb[0].mxu0
  %299 = vmatprep.mubr.f32.mxu0 0.0
  %300 = vmatmul.mubr.f32.gmra.mrb[0].mxu0 %v134
  %v301 = vpop.f32.mrb[0].mxu0
  %v302 = vadd.f32 0.0, %v301
  %v303 = vpop.f32.mrb[0].mxu0
  %304 = vmatprep.mubr.f32.mxu0 0.0
  %305 = vmatmul.mubr.f32.gmra.mrb[0].mxu0 %v137
  %v306 = vpop.f32.mrb[0].mxu0
  %v307 = vadd.f32 0.0, %v306
  %v308 = vpop.f32.mrb[0].mxu0
  %309 = vmatprep.mubr.f32.mxu0 0.0
  %310 = vmatmul.mubr.f32.gmra.mrb[0].mxu0 %v140
  %v311 = vpop.f32.mrb[0].mxu0
  %v312 = vadd.f32 0.0, %v311
  %v313 = vpop.f32.mrb[0].mxu0
  %314 = vmatprep.mubr.f32.mxu0 0.0
  %315 = vmatmul.mubr.f32.gmra.mrb[0].mxu0 %v143
  %v316 = vpop.f32.mrb[0].mxu0
  %v317 = vadd.f32 0.0, %v316
  %v318 = vpop.f32.mrb[0].mxu0
  %319 = vmatprep.mubr.f32.mxu0 0.0
  %320 = vmatmul.mubr.f32.gmra.mrb[0].mxu0 %v146
  %v321 = vpop.f32.mrb[0].mxu0
  %v322 = vadd.f32 0.0, %v321
  %v323 = vpop.f32.mrb[0].mxu0
  %324 = vmatprep.mubr.f32.mxu0 0.0
  %325 = vmatmul.mubr.f32.gmra.mrb[0].mxu0 %v149
  %v326 = vpop.f32.mrb[0].mxu0
  %v327 = vadd.f32 0.0, %v326
  %v328 = vpop.f32.mrb[0].mxu0
  %329 = vmatprep.mubr.f32.mxu0 0.0
  %330 = vmatmul.mubr.f32.gmra.mrb[0].mxu0 %v152
  %v331 = vpop.f32.mrb[0].mxu0
  %v332 = vadd.f32 0.0, %v331
  %v333 = vpop.f32.mrb[0].mxu0
  %334 = vmatprep.mubr.f32.mxu0 0.0
  %335 = vmatmul.mubr.f32.gmra.mrb[0].mxu0 %v155
  %v336 = vpop.f32.mrb[0].mxu0
  %v337 = vadd.f32 0.0, %v336
  %v338 = vpop.f32.mrb[0].mxu0
  %339 = vmatprep.mubr.f32.mxu0 0.0
  %340 = vmatmul.mubr.f32.gmra.mrb[0].mxu0 %v158
  %v341 = vpop.f32.mrb[0].mxu0
  %v342 = vadd.f32 0.0, %v341
  %v343 = vpop.f32.mrb[0].mxu0
  %344 = vmatprep.mubr.f32.mxu0 0.0
  %345 = vmatmul.mubr.f32.gmra.mrb[0].mxu0 %v161
  %v346 = vpop.f32.mrb[0].mxu0
  %v347 = vadd.f32 0.0, %v346
  %v348 = vpop.f32.mrb[0].mxu0
  %349 = vmatprep.mubr.f32.mxu0 0.0
  %350 = vmatmul.mubr.f32.gmra.mrb[0].mxu0 %v164
  %v351 = vpop.f32.mrb[0].mxu0
  %v352 = vadd.f32 0.0, %v351
  %v353 = vpop.f32.mrb[0].mxu0
  %354 = vmatprep.mubr.f32.mxu0 0.0
  %355 = vmatmul.mubr.f32.gmra.mrb[0].mxu0 %v167
  %v356 = vpop.f32.mrb[0].mxu0
  %v357 = vadd.f32 0.0, %v356
  %v358 = vpop.f32.mrb[0].mxu0
  %359 = vmatprep.mubr.f32.mxu0 0.0
  %360 = vmatmul.mubr.f32.gmra.mrb[0].mxu0 %v170
  %v361 = vpop.f32.mrb[0].mxu0
  %v362 = vadd.f32 0.0, %v361
  %v363 = vpop.f32.mrb[0].mxu0
  %364 = vdwg.mxu0
  %v365 = vmul.f32 %v287, 10.0
  %v366 = vmul.f32 %v292, 10.0
  %v367 = vmul.f32 %v297, 10.0
  %v368 = vmul.f32 %v302, 10.0
  %v369 = vmul.f32 %v307, 10.0
  %v370 = vmul.f32 %v312, 10.0
  %v371 = vmul.f32 %v317, 10.0
  %v372 = vmul.f32 %v322, 10.0
  %v373 = vmul.f32 %v327, 10.0
  %v374 = vmul.f32 %v332, 10.0
  %v375 = vmul.f32 %v337, 10.0
  %v376 = vmul.f32 %v342, 10.0
  %v377 = vmul.f32 %v347, 10.0
  %v378 = vmul.f32 %v352, 10.0
  %v379 = vmul.f32 %v357, 10.0
  %v380 = vmul.f32 %v362, 10.0
  %v381 = vld [vmem:[%s2] sm:$0xff]
  %v382 = vld [vmem:[%s2 + $0x8] sm:$0xff]
  %v383 = vld [vmem:[%s2 + $0x10] sm:$0xff]
  %v384 = vld [vmem:[%s2 + $0x18] sm:$0xff]
  %v385 = vld [vmem:[%s2 + $0x20] sm:$0xff]
  %v386 = vld [vmem:[%s2 + $0x28] sm:$0xff]
  %v387 = vld [vmem:[%s2 + $0x30] sm:$0xff]
  %v388 = vld [vmem:[%s2 + $0x38] sm:$0xff]
  %v389 = vld [vmem:[%s2 + $0x40] sm:$0xff]
  %v390 = vld [vmem:[%s2 + $0x48] sm:$0xff]
  %v391 = vld [vmem:[%s2 + $0x50] sm:$0xff]
  %v392 = vld [vmem:[%s2 + $0x58] sm:$0xff]
  %v393 = vld [vmem:[%s2 + $0x60] sm:$0xff]
  %v394 = vld [vmem:[%s2 + $0x68] sm:$0xff]
  %v395 = vld [vmem:[%s2 + $0x70] sm:$0xff]
  %v396 = vld [vmem:[%s2 + $0x78] sm:$0xff]
  %v397 = vld [vmem:[%s3] sm:$0x1]
  %398 = vset.pattern.permute.xlu0 0
  %399 = vperm.xlu0 %398, %v381
  %v400 = vpop.permute.xlu0 %399
  %401 = vset.pattern.permute.xlu0 0
  %402 = vperm.xlu0 %401, %v382
  %v403 = vpop.permute.xlu0 %402
  %404 = vset.pattern.permute.xlu0 0
  %405 = vperm.xlu0 %404, %v383
  %v406 = vpop.permute.xlu0 %405
  %407 = vset.pattern.permute.xlu0 0
  %408 = vperm.xlu0 %407, %v384
  %v409 = vpop.permute.xlu0 %408
  %410 = vset.pattern.permute.xlu0 0
  %411 = vperm.xlu0 %410, %v385
  %v412 = vpop.permute.xlu0 %411
  %413 = vset.pattern.permute.xlu0 0
  %414 = vperm.xlu0 %413, %v386
  %v415 = vpop.permute.xlu0 %414
  %416 = vset.pattern.permute.xlu0 0
  %417 = vperm.xlu0 %416, %v387
  %v418 = vpop.permute.xlu0 %417
  %419 = vset.pattern.permute.xlu0 0
  %420 = vperm.xlu0 %419, %v388
  %v421 = vpop.permute.xlu0 %420
  %422 = vset.pattern.permute.xlu0 0
  %423 = vperm.xlu0 %422, %v389
  %v424 = vpop.permute.xlu0 %423
  %425 = vset.pattern.permute.xlu0 0
  %426 = vperm.xlu0 %425, %v390
  %v427 = vpop.permute.xlu0 %426
  %428 = vset.pattern.permute.xlu0 0
  %429 = vperm.xlu0 %428, %v391
  %v430 = vpop.permute.xlu0 %429
  %431 = vset.pattern.permute.xlu0 0
  %432 = vperm.xlu0 %431, %v392
  %v433 = vpop.permute.xlu0 %432
  %434 = vset.pattern.permute.xlu0 0
  %435 = vperm.xlu0 %434, %v393
  %v436 = vpop.permute.xlu0 %435
  %437 = vset.pattern.permute.xlu0 0
  %438 = vperm.xlu0 %437, %v394
  %v439 = vpop.permute.xlu0 %438
  %440 = vset.pattern.permute.xlu0 0
  %441 = vperm.xlu0 %440, %v395
  %v442 = vpop.permute.xlu0 %441
  %443 = vset.pattern.permute.xlu0 0
  %444 = vperm.xlu0 %443, %v396
  %v445 = vpop.permute.xlu0 %444
  %v446 = vlaneseq
  %v447 = vshrl.u32 %v446, 7
  %v448 = vsub.s32 0, %v447
  %v449 = vrot.slane %v397, %v448
  %vm450 = vcmp.eq.s32.totalorder %v400, %v449
  %vm451 = vcmp.eq.s32.totalorder %v403, %v449
  %vm452 = vcmp.eq.s32.totalorder %v406, %v449
  %vm453 = vcmp.eq.s32.totalorder %v409, %v449
  %vm454 = vcmp.eq.s32.totalorder %v412, %v449
  %vm455 = vcmp.eq.s32.totalorder %v415, %v449
  %vm456 = vcmp.eq.s32.totalorder %v418, %v449
  %vm457 = vcmp.eq.s32.totalorder %v421, %v449
  %vm458 = vcmp.eq.s32.totalorder %v424, %v449
  %vm459 = vcmp.eq.s32.totalorder %v427, %v449
  %vm460 = vcmp.eq.s32.totalorder %v430, %v449
  %vm461 = vcmp.eq.s32.totalorder %v433, %v449
  %vm462 = vcmp.eq.s32.totalorder %v436, %v449
  %vm463 = vcmp.eq.s32.totalorder %v439, %v449
  %vm464 = vcmp.eq.s32.totalorder %v442, %v449
  %vm465 = vcmp.eq.s32.totalorder %v445, %v449
  %v466 = vsel %vm450, 1, 0
  %v467 = vsel %vm451, 1, 0
  %v468 = vsel %vm452, 1, 0
  %v469 = vsel %vm453, 1, 0
  %v470 = vsel %vm454, 1, 0
  %v471 = vsel %vm455, 1, 0
  %v472 = vsel %vm456, 1, 0
  %v473 = vsel %vm457, 1, 0
  %v474 = vsel %vm458, 1, 0
  %v475 = vsel %vm459, 1, 0
  %v476 = vsel %vm460, 1, 0
  %v477 = vsel %vm461, 1, 0
  %v478 = vsel %vm462, 1, 0
  %v479 = vsel %vm463, 1, 0
  %v480 = vsel %vm464, 1, 0
  %v481 = vsel %vm465, 1, 0
  %v482 = vcvt.s32.f32 %v466
  %v483 = vcvt.s32.f32 %v467
  %v484 = vcvt.s32.f32 %v468
  %v485 = vcvt.s32.f32 %v469
  %v486 = vcvt.s32.f32 %v470
  %v487 = vcvt.s32.f32 %v471
  %v488 = vcvt.s32.f32 %v472
  %v489 = vcvt.s32.f32 %v473
  %v490 = vcvt.s32.f32 %v474
  %v491 = vcvt.s32.f32 %v475
  %v492 = vcvt.s32.f32 %v476
  %v493 = vcvt.s32.f32 %v477
  %v494 = vcvt.s32.f32 %v478
  %v495 = vcvt.s32.f32 %v479
  %v496 = vcvt.s32.f32 %v480
  %v497 = vcvt.s32.f32 %v481
  %v498 = vsub.f32 %v365, 10.0
  %v499 = vsub.f32 %v366, 10.0
  %v500 = vsub.f32 %v367, 10.0
  %v501 = vsub.f32 %v368, 10.0
  %v502 = vsub.f32 %v369, 10.0
  %v503 = vsub.f32 %v370, 10.0
  %v504 = vsub.f32 %v371, 10.0
  %v505 = vsub.f32 %v372, 10.0
  %v506 = vsub.f32 %v373, 10.0
  %v507 = vsub.f32 %v374, 10.0
  %v508 = vsub.f32 %v375, 10.0
  %v509 = vsub.f32 %v376, 10.0
  %v510 = vsub.f32 %v377, 10.0
  %v511 = vsub.f32 %v378, 10.0
  %v512 = vsub.f32 %v379, 10.0
  %v513 = vsub.f32 %v380, 10.0
  %v514 = vmul.f32 %v498, 1.442695
  %v515 = vpow.pop %v514
  %v516 = vmul.f32 %v499, 1.442695
  %v517 = vpow.pop %v516
  %v518 = vmul.f32 %v500, 1.442695
  %v519 = vpow.pop %v518
  %v520 = vmul.f32 %v501, 1.442695
  %v521 = vpow.pop %v520
  %v522 = vmul.f32 %v502, 1.442695
  %v523 = vpow.pop %v522
  %v524 = vmul.f32 %v503, 1.442695
  %v525 = vpow.pop %v524
  %v526 = vmul.f32 %v504, 1.442695
  %v527 = vpow.pop %v526
  %v528 = vmul.f32 %v505, 1.442695
  %v529 = vpow.pop %v528
  %v530 = vmul.f32 %v506, 1.442695
  %v531 = vpow.pop %v530
  %v532 = vmul.f32 %v507, 1.442695
  %v533 = vpow.pop %v532
  %v534 = vmul.f32 %v508, 1.442695
  %v535 = vpow.pop %v534
  %v536 = vmul.f32 %v509, 1.442695
  %v537 = vpow.pop %v536
  %v538 = vmul.f32 %v510, 1.442695
  %v539 = vpow.pop %v538
  %v540 = vmul.f32 %v511, 1.442695
  %v541 = vpow.pop %v540
  %v542 = vmul.f32 %v512, 1.442695
  %v543 = vpow.pop %v542
  %v544 = vmul.f32 %v513, 1.442695
  %v545 = vpow.pop %v544
  %v546 = vld [vmem:[%s4] sm:$0x1]
  %v548 = vlaneseq
  %v549 = vshrl.u32 %v548, 7
  %v550 = vsub.s32 0, %v549
  %v551 = vrot.slane %v546, %v550
  %v553 = vmul.f32 %v515, %v551
  %v554 = vmul.f32 %v517, %v551
  %v555 = vmul.f32 %v519, %v551
  %v556 = vmul.f32 %v521, %v551
  %v557 = vmul.f32 %v523, %v551
  %v558 = vmul.f32 %v525, %v551
  %v559 = vmul.f32 %v527, %v551
  %v560 = vmul.f32 %v529, %v551
  %v561 = vmul.f32 %v531, %v551
  %v562 = vmul.f32 %v533, %v551
  %v563 = vmul.f32 %v535, %v551
  %v564 = vmul.f32 %v537, %v551
  %v565 = vmul.f32 %v539, %v551
  %v566 = vmul.f32 %v541, %v551
  %v567 = vmul.f32 %v543, %v551
  %v568 = vmul.f32 %v545, %v551
  %v569 = vld [vmem:[#allocation2] sm:$0xff]
  %v570 = vld [vmem:[#allocation2 + $0x8] sm:$0xff]
  %v571 = vld [vmem:[#allocation2 + $0x10] sm:$0xff]
  %v572 = vld [vmem:[#allocation2 + $0x18] sm:$0xff]
  %v573 = vld [vmem:[#allocation2 + $0x20] sm:$0xff]
  %v574 = vld [vmem:[#allocation2 + $0x28] sm:$0xff]
  %v575 = vld [vmem:[#allocation2 + $0x30] sm:$0xff]
  %v576 = vld [vmem:[#allocation2 + $0x38] sm:$0xff]
  %v577 = vld [vmem:[#allocation2 + $0x40] sm:$0xff]
  %v578 = vld [vmem:[#allocation2 + $0x48] sm:$0xff]
  %v579 = vld [vmem:[#allocation2 + $0x50] sm:$0xff]
  %v580 = vld [vmem:[#allocation2 + $0x58] sm:$0xff]
  %v581 = vld [vmem:[#allocation2 + $0x60] sm:$0xff]
  %v582 = vld [vmem:[#allocation2 + $0x68] sm:$0xff]
  %v583 = vld [vmem:[#allocation2 + $0x70] sm:$0xff]
  %v584 = vld [vmem:[#allocation2 + $0x78] sm:$0xff]
  %585 = vadd.xlane.f32.xlu0 %v553
  %v586 = vpop.xlane.xlu0 %585
  %587 = vadd.xlane.f32.xlu0 %v554
  %v588 = vpop.xlane.xlu0 %587
  %589 = vadd.xlane.f32.xlu0 %v555
  %v590 = vpop.xlane.xlu0 %589
  %591 = vadd.xlane.f32.xlu0 %v556
  %v592 = vpop.xlane.xlu0 %591
  %593 = vadd.xlane.f32.xlu0 %v557
  %v594 = vpop.xlane.xlu0 %593
  %595 = vadd.xlane.f32.xlu0 %v558
  %v596 = vpop.xlane.xlu0 %595
  %597 = vadd.xlane.f32.xlu0 %v559
  %v598 = vpop.xlane.xlu0 %597
  %599 = vadd.xlane.f32.xlu0 %v560
  %v600 = vpop.xlane.xlu0 %599
  %601 = vadd.xlane.f32.xlu0 %v561
  %v602 = vpop.xlane.xlu0 %601
  %603 = vadd.xlane.f32.xlu0 %v562
  %v604 = vpop.xlane.xlu0 %603
  %605 = vadd.xlane.f32.xlu0 %v563
  %v606 = vpop.xlane.xlu0 %605
  %607 = vadd.xlane.f32.xlu0 %v564
  %v608 = vpop.xlane.xlu0 %607
  %609 = vadd.xlane.f32.xlu0 %v565
  %v610 = vpop.xlane.xlu0 %609
  %611 = vadd.xlane.f32.xlu0 %v566
  %v612 = vpop.xlane.xlu0 %611
  %613 = vadd.xlane.f32.xlu0 %v567
  %v614 = vpop.xlane.xlu0 %613
  %615 = vadd.xlane.f32.xlu0 %v568
  %v616 = vpop.xlane.xlu0 %615
  %v617 = vadd.f32 %v569, %v586
  %v618 = vadd.f32 %v570, %v588
  %v619 = vadd.f32 %v571, %v590
  %v620 = vadd.f32 %v572, %v592
  %v621 = vadd.f32 %v573, %v594
  %v622 = vadd.f32 %v574, %v596
  %v623 = vadd.f32 %v575, %v598
  %v624 = vadd.f32 %v576, %v600
  %v625 = vadd.f32 %v577, %v602
  %v626 = vadd.f32 %v578, %v604
  %v627 = vadd.f32 %v579, %v606
  %v628 = vadd.f32 %v580, %v608
  %v629 = vadd.f32 %v581, %v610
  %v630 = vadd.f32 %v582, %v612
  %v631 = vadd.f32 %v583, %v614
  %v632 = vadd.f32 %v584, %v616
  %vm633 = vcmask 7168
  %634 = vst.msk [vmem:[#allocation2] sm:$0xff] %vm633, %v617
  %635 = vst.msk [vmem:[#allocation2 + $0x8] sm:$0xff] %vm633, %v618
  %636 = vst.msk [vmem:[#allocation2 + $0x10] sm:$0xff] %vm633, %v619
  %637 = vst.msk [vmem:[#allocation2 + $0x18] sm:$0xff] %vm633, %v620
  %638 = vst.msk [vmem:[#allocation2 + $0x20] sm:$0xff] %vm633, %v621
  %639 = vst.msk [vmem:[#allocation2 + $0x28] sm:$0xff] %vm633, %v622
  %640 = vst.msk [vmem:[#allocation2 + $0x30] sm:$0xff] %vm633, %v623
  %641 = vst.msk [vmem:[#allocation2 + $0x38] sm:$0xff] %vm633, %v624
  %642 = vst.msk [vmem:[#allocation2 + $0x40] sm:$0xff] %vm633, %v625
  %643 = vst.msk [vmem:[#allocation2 + $0x48] sm:$0xff] %vm633, %v626
  %644 = vst.msk [vmem:[#allocation2 + $0x50] sm:$0xff] %vm633, %v627
  %645 = vst.msk [vmem:[#allocation2 + $0x58] sm:$0xff] %vm633, %v628
  %646 = vst.msk [vmem:[#allocation2 + $0x60] sm:$0xff] %vm633, %v629
  %647 = vst.msk [vmem:[#allocation2 + $0x68] sm:$0xff] %vm633, %v630
  %648 = vst.msk [vmem:[#allocation2 + $0x70] sm:$0xff] %vm633, %v631
  %649 = vst.msk [vmem:[#allocation2 + $0x78] sm:$0xff] %vm633, %v632
  %v650 = vld [vmem:[#allocation3] sm:$0xff]
  %v651 = vld [vmem:[#allocation3 + $0x8] sm:$0xff]
  %v652 = vld [vmem:[#allocation3 + $0x10] sm:$0xff]
  %v653 = vld [vmem:[#allocation3 + $0x18] sm:$0xff]
  %v654 = vld [vmem:[#allocation3 + $0x20] sm:$0xff]
  %v655 = vld [vmem:[#allocation3 + $0x28] sm:$0xff]
  %v656 = vld [vmem:[#allocation3 + $0x30] sm:$0xff]
  %v657 = vld [vmem:[#allocation3 + $0x38] sm:$0xff]
  %v658 = vld [vmem:[#allocation3 + $0x40] sm:$0xff]
  %v659 = vld [vmem:[#allocation3 + $0x48] sm:$0xff]
  %v660 = vld [vmem:[#allocation3 + $0x50] sm:$0xff]
  %v661 = vld [vmem:[#allocation3 + $0x58] sm:$0xff]
  %v662 = vld [vmem:[#allocation3 + $0x60] sm:$0xff]
  %v663 = vld [vmem:[#allocation3 + $0x68] sm:$0xff]
  %v664 = vld [vmem:[#allocation3 + $0x70] sm:$0xff]
  %v665 = vld [vmem:[#allocation3 + $0x78] sm:$0xff]
  %v666 = vmul.f32 %v365, %v482
  %v667 = vmul.f32 %v366, %v483
  %v668 = vmul.f32 %v367, %v484
  %v669 = vmul.f32 %v368, %v485
  %v670 = vmul.f32 %v369, %v486
  %v671 = vmul.f32 %v370, %v487
  %v672 = vmul.f32 %v371, %v488
  %v673 = vmul.f32 %v372, %v489
  %v674 = vmul.f32 %v373, %v490
  %v675 = vmul.f32 %v374, %v491
  %v676 = vmul.f32 %v375, %v492
  %v677 = vmul.f32 %v376, %v493
  %v678 = vmul.f32 %v377, %v494
  %v679 = vmul.f32 %v378, %v495
  %v680 = vmul.f32 %v379, %v496
  %v681 = vmul.f32 %v380, %v497
  %682 = vadd.xlane.f32.xlu0 %v666
  %v683 = vpop.xlane.xlu0 %682
  %684 = vadd.xlane.f32.xlu0 %v667
  %v685 = vpop.xlane.xlu0 %684
  %686 = vadd.xlane.f32.xlu0 %v668
  %v687 = vpop.xlane.xlu0 %686
  %688 = vadd.xlane.f32.xlu0 %v669
  %v689 = vpop.xlane.xlu0 %688
  %690 = vadd.xlane.f32.xlu0 %v670
  %v691 = vpop.xlane.xlu0 %690
  %692 = vadd.xlane.f32.xlu0 %v671
  %v693 = vpop.xlane.xlu0 %692
  %694 = vadd.xlane.f32.xlu0 %v672
  %v695 = vpop.xlane.xlu0 %694
  %696 = vadd.xlane.f32.xlu0 %v673
  %v697 = vpop.xlane.xlu0 %696
  %698 = vadd.xlane.f32.xlu0 %v674
  %v699 = vpop.xlane.xlu0 %698
  %700 = vadd.xlane.f32.xlu0 %v675
  %v701 = vpop.xlane.xlu0 %700
  %702 = vadd.xlane.f32.xlu0 %v676
  %v703 = vpop.xlane.xlu0 %702
  %704 = vadd.xlane.f32.xlu0 %v677
  %v705 = vpop.xlane.xlu0 %704
  %706 = vadd.xlane.f32.xlu0 %v678
  %v707 = vpop.xlane.xlu0 %706
  %708 = vadd.xlane.f32.xlu0 %v679
  %v709 = vpop.xlane.xlu0 %708
  %710 = vadd.xlane.f32.xlu0 %v680
  %v711 = vpop.xlane.xlu0 %710
  %712 = vadd.xlane.f32.xlu0 %v681
  %v713 = vpop.xlane.xlu0 %712
  %v714 = vadd.f32 %v650, %v683
  %v715 = vadd.f32 %v651, %v685
  %v716 = vadd.f32 %v652, %v687
  %v717 = vadd.f32 %v653, %v689
  %v718 = vadd.f32 %v654, %v691
  %v719 = vadd.f32 %v655, %v693
  %v720 = vadd.f32 %v656, %v695
  %v721 = vadd.f32 %v657, %v697
  %v722 = vadd.f32 %v658, %v699
  %v723 = vadd.f32 %v659, %v701
  %v724 = vadd.f32 %v660, %v703
  %v725 = vadd.f32 %v661, %v705
  %v726 = vadd.f32 %v662, %v707
  %v727 = vadd.f32 %v663, %v709
  %v728 = vadd.f32 %v664, %v711
  %v729 = vadd.f32 %v665, %v713
  %730 = vst.msk [vmem:[#allocation3] sm:$0xff] %vm633, %v714
  %731 = vst.msk [vmem:[#allocation3 + $0x8] sm:$0xff] %vm633, %v715
  %732 = vst.msk [vmem:[#allocation3 + $0x10] sm:$0xff] %vm633, %v716
  %733 = vst.msk [vmem:[#allocation3 + $0x18] sm:$0xff] %vm633, %v717
  %734 = vst.msk [vmem:[#allocation3 + $0x20] sm:$0xff] %vm633, %v718
  %735 = vst.msk [vmem:[#allocation3 + $0x28] sm:$0xff] %vm633, %v719
  %736 = vst.msk [vmem:[#allocation3 + $0x30] sm:$0xff] %vm633, %v720
  %737 = vst.msk [vmem:[#allocation3 + $0x38] sm:$0xff] %vm633, %v721
  %738 = vst.msk [vmem:[#allocation3 + $0x40] sm:$0xff] %vm633, %v722
  %739 = vst.msk [vmem:[#allocation3 + $0x48] sm:$0xff] %vm633, %v723
  %740 = vst.msk [vmem:[#allocation3 + $0x50] sm:$0xff] %vm633, %v724
  %741 = vst.msk [vmem:[#allocation3 + $0x58] sm:$0xff] %vm633, %v725
  %742 = vst.msk [vmem:[#allocation3 + $0x60] sm:$0xff] %vm633, %v726
  %743 = vst.msk [vmem:[#allocation3 + $0x68] sm:$0xff] %vm633, %v727
  %744 = vst.msk [vmem:[#allocation3 + $0x70] sm:$0xff] %vm633, %v728
  %745 = vst.msk [vmem:[#allocation3 + $0x78] sm:$0xff] %vm633, %v729
  %v746 = vld [vmem:[#allocation4] sm:$0xff]
  %v747 = vld [vmem:[#allocation4 + $0x8] sm:$0xff]
  %v748 = vld [vmem:[#allocation4 + $0x10] sm:$0xff]
  %v749 = vld [vmem:[#allocation4 + $0x18] sm:$0xff]
  %v750 = vld [vmem:[#allocation4 + $0x20] sm:$0xff]
  %v751 = vld [vmem:[#allocation4 + $0x28] sm:$0xff]
  %v752 = vld [vmem:[#allocation4 + $0x30] sm:$0xff]
  %v753 = vld [vmem:[#allocation4 + $0x38] sm:$0xff]
  %v754 = vld [vmem:[#allocation4 + $0x40] sm:$0xff]
  %v755 = vld [vmem:[#allocation4 + $0x48] sm:$0xff]
  %v756 = vld [vmem:[#allocation4 + $0x50] sm:$0xff]
  %v757 = vld [vmem:[#allocation4 + $0x58] sm:$0xff]
  %v758 = vld [vmem:[#allocation4 + $0x60] sm:$0xff]
  %v759 = vld [vmem:[#allocation4 + $0x68] sm:$0xff]
  %v760 = vld [vmem:[#allocation4 + $0x70] sm:$0xff]
  %v761 = vld [vmem:[#allocation4 + $0x78] sm:$0xff]
  %762 = vadd.xlane.f32.xlu0 %v482
  %v763 = vpop.xlane.xlu0 %762
  %764 = vadd.xlane.f32.xlu0 %v483
  %v765 = vpop.xlane.xlu0 %764
  %766 = vadd.xlane.f32.xlu0 %v484
  %v767 = vpop.xlane.xlu0 %766
  %768 = vadd.xlane.f32.xlu0 %v485
  %v769 = vpop.xlane.xlu0 %768
  %770 = vadd.xlane.f32.xlu0 %v486
  %v771 = vpop.xlane.xlu0 %770
  %772 = vadd.xlane.f32.xlu0 %v487
  %v773 = vpop.xlane.xlu0 %772
  %774 = vadd.xlane.f32.xlu0 %v488
  %v775 = vpop.xlane.xlu0 %774
  %776 = vadd.xlane.f32.xlu0 %v489
  %v777 = vpop.xlane.xlu0 %776
  %778 = vadd.xlane.f32.xlu0 %v490
  %v779 = vpop.xlane.xlu0 %778
  %780 = vadd.xlane.f32.xlu0 %v491
  %v781 = vpop.xlane.xlu0 %780
  %782 = vadd.xlane.f32.xlu0 %v492
  %v783 = vpop.xlane.xlu0 %782
  %784 = vadd.xlane.f32.xlu0 %v493
  %v785 = vpop.xlane.xlu0 %784
  %786 = vadd.xlane.f32.xlu0 %v494
  %v787 = vpop.xlane.xlu0 %786
  %788 = vadd.xlane.f32.xlu0 %v495
  %v789 = vpop.xlane.xlu0 %788
  %790 = vadd.xlane.f32.xlu0 %v496
  %v791 = vpop.xlane.xlu0 %790
  %792 = vadd.xlane.f32.xlu0 %v497
  %v793 = vpop.xlane.xlu0 %792
  %v794 = vadd.f32 %v746, %v763
  %v795 = vadd.f32 %v747, %v765
  %v796 = vadd.f32 %v748, %v767
  %v797 = vadd.f32 %v749, %v769
  %v798 = vadd.f32 %v750, %v771
  %v799 = vadd.f32 %v751, %v773
  %v800 = vadd.f32 %v752, %v775
  %v801 = vadd.f32 %v753, %v777
  %v802 = vadd.f32 %v754, %v779
  %v803 = vadd.f32 %v755, %v781
  %v804 = vadd.f32 %v756, %v783
  %v805 = vadd.f32 %v757, %v785
  %v806 = vadd.f32 %v758, %v787
  %v807 = vadd.f32 %v759, %v789
  %v808 = vadd.f32 %v760, %v791
  %v809 = vadd.f32 %v761, %v793
  %810 = vst.msk [vmem:[#allocation4] sm:$0xff] %vm633, %v794
  %811 = vst.msk [vmem:[#allocation4 + $0x8] sm:$0xff] %vm633, %v795
  %812 = vst.msk [vmem:[#allocation4 + $0x10] sm:$0xff] %vm633, %v796
  %813 = vst.msk [vmem:[#allocation4 + $0x18] sm:$0xff] %vm633, %v797
  %814 = vst.msk [vmem:[#allocation4 + $0x20] sm:$0xff] %vm633, %v798
  %815 = vst.msk [vmem:[#allocation4 + $0x28] sm:$0xff] %vm633, %v799
  %816 = vst.msk [vmem:[#allocation4 + $0x30] sm:$0xff] %vm633, %v800
  %817 = vst.msk [vmem:[#allocation4 + $0x38] sm:$0xff] %vm633, %v801
  %818 = vst.msk [vmem:[#allocation4 + $0x40] sm:$0xff] %vm633, %v802
  %819 = vst.msk [vmem:[#allocation4 + $0x48] sm:$0xff] %vm633, %v803
  %820 = vst.msk [vmem:[#allocation4 + $0x50] sm:$0xff] %vm633, %v804
  %821 = vst.msk [vmem:[#allocation4 + $0x58] sm:$0xff] %vm633, %v805
  %822 = vst.msk [vmem:[#allocation4 + $0x60] sm:$0xff] %vm633, %v806
  %823 = vst.msk [vmem:[#allocation4 + $0x68] sm:$0xff] %vm633, %v807
  %824 = vst.msk [vmem:[#allocation4 + $0x70] sm:$0xff] %vm633, %v808
  %825 = vst.msk [vmem:[#allocation4 + $0x78] sm:$0xff] %vm633, %v809
  %p826 = scmp.eq.s32.totalorder 0, 0
  // Predicated region
  $region26: #{tpu_custom_call.1} parent=0 // pred_check
    %p827 = pneg %p826
  $region27: #{tpu_custom_call.1} parent=0 // pred_check_branch
    %829 = sbr.rel (%p827) target = $region29
  $region28: #{tpu_custom_call.1} parent=0 // pred_region
    %v830 = vlaneseq
    %v831 = vshrl.u32 %v830, 7
    %v832 = vadd.s32 %v831, 8
    %v833 = vadd.s32 %v831, 16
    %v834 = vadd.s32 %v831, 24
    %v835 = vadd.s32 %v831, 32
    %v836 = vadd.s32 %v831, 40
    %v837 = vadd.s32 %v831, 48
    %v838 = vadd.s32 %v831, 56
    %v839 = vadd.s32 %v831, 64
    %v840 = vadd.s32 %v831, 72
    %v841 = vadd.s32 %v831, 80
    %v842 = vadd.s32 %v831, 88
    %v843 = vadd.s32 %v831, 96
    %v844 = vadd.s32 %v831, 104
    %v845 = vadd.s32 %v831, 112
    %v846 = vadd.s32 %v831, 120
    %v847 = vlaneseq
    %v848 = vand.u32 %v847, 127
    %vm849 = vcmp.eq.s32.totalorder %v831, %v848
    %vm850 = vcmp.eq.s32.totalorder %v832, %v848
    %vm851 = vcmp.eq.s32.totalorder %v833, %v848
    %vm852 = vcmp.eq.s32.totalorder %v834, %v848
    %vm853 = vcmp.eq.s32.totalorder %v835, %v848
    %vm854 = vcmp.eq.s32.totalorder %v836, %v848
    %vm855 = vcmp.eq.s32.totalorder %v837, %v848
    %vm856 = vcmp.eq.s32.totalorder %v838, %v848
    %vm857 = vcmp.eq.s32.totalorder %v839, %v848
    %vm858 = vcmp.eq.s32.totalorder %v840, %v848
    %vm859 = vcmp.eq.s32.totalorder %v841, %v848
    %vm860 = vcmp.eq.s32.totalorder %v842, %v848
    %vm861 = vcmp.eq.s32.totalorder %v843, %v848
    %vm862 = vcmp.eq.s32.totalorder %v844, %v848
    %vm863 = vcmp.eq.s32.totalorder %v845, %v848
    %vm864 = vcmp.eq.s32.totalorder %v846, %v848
    %v865 = vsel %vm849, %v365, 0.0
    %v866 = vsel %vm850, %v366, 0.0
    %v867 = vsel %vm851, %v367, 0.0
    %v868 = vsel %vm852, %v368, 0.0
    %v869 = vsel %vm853, %v369, 0.0
    %v870 = vsel %vm854, %v370, 0.0
    %v871 = vsel %vm855, %v371, 0.0
    %v872 = vsel %vm856, %v372, 0.0
    %v873 = vsel %vm857, %v373, 0.0
    %v874 = vsel %vm858, %v374, 0.0
    %v875 = vsel %vm859, %v375, 0.0
    %v876 = vsel %vm860, %v376, 0.0
    %v877 = vsel %vm861, %v377, 0.0
    %v878 = vsel %vm862, %v378, 0.0
    %v879 = vsel %vm863, %v379, 0.0
    %v880 = vsel %vm864, %v380, 0.0
    %881 = vadd.xlane.f32.xlu0 %v865
    %v882 = vpop.xlane.xlu0 %881
    %883 = vadd.xlane.f32.xlu0 %v866
    %v884 = vpop.xlane.xlu0 %883
    %885 = vadd.xlane.f32.xlu0 %v867
    %v886 = vpop.xlane.xlu0 %885
    %887 = vadd.xlane.f32.xlu0 %v868
    %v888 = vpop.xlane.xlu0 %887
    %889 = vadd.xlane.f32.xlu0 %v869
    %v890 = vpop.xlane.xlu0 %889
    %891 = vadd.xlane.f32.xlu0 %v870
    %v892 = vpop.xlane.xlu0 %891
    %893 = vadd.xlane.f32.xlu0 %v871
    %v894 = vpop.xlane.xlu0 %893
    %895 = vadd.xlane.f32.xlu0 %v872
    %v896 = vpop.xlane.xlu0 %895
    %897 = vadd.xlane.f32.xlu0 %v873
    %v898 = vpop.xlane.xlu0 %897
    %899 = vadd.xlane.f32.xlu0 %v874
    %v900 = vpop.xlane.xlu0 %899
    %901 = vadd.xlane.f32.xlu0 %v875
    %v902 = vpop.xlane.xlu0 %901
    %903 = vadd.xlane.f32.xlu0 %v876
    %v904 = vpop.xlane.xlu0 %903
    %905 = vadd.xlane.f32.xlu0 %v877
    %v906 = vpop.xlane.xlu0 %905
    %907 = vadd.xlane.f32.xlu0 %v878
    %v908 = vpop.xlane.xlu0 %907
    %909 = vadd.xlane.f32.xlu0 %v879
    %v910 = vpop.xlane.xlu0 %909
    %911 = vadd.xlane.f32.xlu0 %v880
    %v912 = vpop.xlane.xlu0 %911
    %913 = vst.msk [vmem:[#allocation5] sm:$0xff] %vm633, %v882
    %914 = vst.msk [vmem:[#allocation5 + $0x8] sm:$0xff] %vm633, %v884
    %915 = vst.msk [vmem:[#allocation5 + $0x10] sm:$0xff] %vm633, %v886
    %916 = vst.msk [vmem:[#allocation5 + $0x18] sm:$0xff] %vm633, %v888
    %917 = vst.msk [vmem:[#allocation5 + $0x20] sm:$0xff] %vm633, %v890
    %918 = vst.msk [vmem:[#allocation5 + $0x28] sm:$0xff] %vm633, %v892
    %919 = vst.msk [vmem:[#allocation5 + $0x30] sm:$0xff] %vm633, %v894
    %920 = vst.msk [vmem:[#allocation5 + $0x38] sm:$0xff] %vm633, %v896
    %921 = vst.msk [vmem:[#allocation5 + $0x40] sm:$0xff] %vm633, %v898
    %922 = vst.msk [vmem:[#allocation5 + $0x48] sm:$0xff] %vm633, %v900
    %923 = vst.msk [vmem:[#allocation5 + $0x50] sm:$0xff] %vm633, %v902
    %924 = vst.msk [vmem:[#allocation5 + $0x58] sm:$0xff] %vm633, %v904
    %925 = vst.msk [vmem:[#allocation5 + $0x60] sm:$0xff] %vm633, %v906
    %926 = vst.msk [vmem:[#allocation5 + $0x68] sm:$0xff] %vm633, %v908
    %927 = vst.msk [vmem:[#allocation5 + $0x70] sm:$0xff] %vm633, %v910
    %928 = vst.msk [vmem:[#allocation5 + $0x78] sm:$0xff] %vm633, %v912
  $region29: #{tpu_custom_call.1} parent=0 // pred_fallthru
    _
  // Predicated region
  $region30: #{tpu_custom_call.1} parent=0 // pred_check
    %p929 = pneg %p22
  $region31: #{tpu_custom_call.1} parent=0 // pred_check_branch
    %931 = sbr.rel (%p929) target = $region33
  $region32: #{tpu_custom_call.1} parent=0 // pred_region
    %v932 = vld [vmem:[#allocation5] sm:$0xff]
    %v933 = vld [vmem:[#allocation5 + $0x8] sm:$0xff]
    %v934 = vld [vmem:[#allocation5 + $0x10] sm:$0xff]
    %v935 = vld [vmem:[#allocation5 + $0x18] sm:$0xff]
    %v936 = vld [vmem:[#allocation5 + $0x20] sm:$0xff]
    %v937 = vld [vmem:[#allocation5 + $0x28] sm:$0xff]
    %v938 = vld [vmem:[#allocation5 + $0x30] sm:$0xff]
    %v939 = vld [vmem:[#allocation5 + $0x38] sm:$0xff]
    %v940 = vld [vmem:[#allocation5 + $0x40] sm:$0xff]
    %v941 = vld [vmem:[#allocation5 + $0x48] sm:$0xff]
    %v942 = vld [vmem:[#allocation5 + $0x50] sm:$0xff]
    %v943 = vld [vmem:[#allocation5 + $0x58] sm:$0xff]
    %v944 = vld [vmem:[#allocation5 + $0x60] sm:$0xff]
    %v945 = vld [vmem:[#allocation5 + $0x68] sm:$0xff]
    %v946 = vld [vmem:[#allocation5 + $0x70] sm:$0xff]
    %v947 = vld [vmem:[#allocation5 + $0x78] sm:$0xff]
    %v948 = vld [vmem:[#allocation2] sm:$0xff]
    %v949 = vld [vmem:[#allocation2 + $0x8] sm:$0xff]
    %v950 = vld [vmem:[#allocation2 + $0x10] sm:$0xff]
    %v951 = vld [vmem:[#allocation2 + $0x18] sm:$0xff]
    %v952 = vld [vmem:[#allocation2 + $0x20] sm:$0xff]
    %v953 = vld [vmem:[#allocation2 + $0x28] sm:$0xff]
    %v954 = vld [vmem:[#allocation2 + $0x30] sm:$0xff]
    %v955 = vld [vmem:[#allocation2 + $0x38] sm:$0xff]
    %v956 = vld [vmem:[#allocation2 + $0x40] sm:$0xff]
    %v957 = vld [vmem:[#allocation2 + $0x48] sm:$0xff]
    %v958 = vld [vmem:[#allocation2 + $0x50] sm:$0xff]
    %v959 = vld [vmem:[#allocation2 + $0x58] sm:$0xff]
    %v960 = vld [vmem:[#allocation2 + $0x60] sm:$0xff]
    %v961 = vld [vmem:[#allocation2 + $0x68] sm:$0xff]
    %v962 = vld [vmem:[#allocation2 + $0x70] sm:$0xff]
    %v963 = vld [vmem:[#allocation2 + $0x78] sm:$0xff]
    %v964 = vsub.f32 %v932, 10.0
    %v965 = vsub.f32 %v933, 10.0
    %v966 = vsub.f32 %v934, 10.0
    %v967 = vsub.f32 %v935, 10.0
    %v968 = vsub.f32 %v936, 10.0
    %v969 = vsub.f32 %v937, 10.0
    %v970 = vsub.f32 %v938, 10.0
    %v971 = vsub.f32 %v939, 10.0
    %v972 = vsub.f32 %v940, 10.0
    %v973 = vsub.f32 %v941, 10.0
    %v974 = vsub.f32 %v942, 10.0
    %v975 = vsub.f32 %v943, 10.0
    %v976 = vsub.f32 %v944, 10.0
    %v977 = vsub.f32 %v945, 10.0
    %v978 = vsub.f32 %v946, 10.0
    %v979 = vsub.f32 %v947, 10.0
    %v980 = vmul.f32 %v964, 1.442695
    %v981 = vpow.pop %v980
    %v982 = vmul.f32 %v965, 1.442695
    %v983 = vpow.pop %v982
    %v984 = vmul.f32 %v966, 1.442695
    %v985 = vpow.pop %v984
    %v986 = vmul.f32 %v967, 1.442695
    %v987 = vpow.pop %v986
    %v988 = vmul.f32 %v968, 1.442695
    %v989 = vpow.pop %v988
    %v990 = vmul.f32 %v969, 1.442695
    %v991 = vpow.pop %v990
    %v992 = vmul.f32 %v970, 1.442695
    %v993 = vpow.pop %v992
    %v994 = vmul.f32 %v971, 1.442695
    %v995 = vpow.pop %v994
    %v996 = vmul.f32 %v972, 1.442695
    %v997 = vpow.pop %v996
    %v998 = vmul.f32 %v973, 1.442695
    %v999 = vpow.pop %v998
    %v1000 = vmul.f32 %v974, 1.442695
    %v1001 = vpow.pop %v1000
    %v1002 = vmul.f32 %v975, 1.442695
    %v1003 = vpow.pop %v1002
    %v1004 = vmul.f32 %v976, 1.442695
    %v1005 = vpow.pop %v1004
    %v1006 = vmul.f32 %v977, 1.442695
    %v1007 = vpow.pop %v1006
    %v1008 = vmul.f32 %v978, 1.442695
    %v1009 = vpow.pop %v1008
    %v1010 = vmul.f32 %v979, 1.442695
    %v1011 = vpow.pop %v1010
    %v1012 = vsub.f32 %v948, %v981
    %v1013 = vsub.f32 %v949, %v983
    %v1014 = vsub.f32 %v950, %v985
    %v1015 = vsub.f32 %v951, %v987
    %v1016 = vsub.f32 %v952, %v989
    %v1017 = vsub.f32 %v953, %v991
    %v1018 = vsub.f32 %v954, %v993
    %v1019 = vsub.f32 %v955, %v995
    %v1020 = vsub.f32 %v956, %v997
    %v1021 = vsub.f32 %v957, %v999
    %v1022 = vsub.f32 %v958, %v1001
    %v1023 = vsub.f32 %v959, %v1003
    %v1024 = vsub.f32 %v960, %v1005
    %v1025 = vsub.f32 %v961, %v1007
    %v1026 = vsub.f32 %v962, %v1009
    %v1027 = vsub.f32 %v963, %v1011
    %v1028 = vld [vmem:[#allocation4] sm:$0xff]
    %v1029 = vld [vmem:[#allocation4 + $0x8] sm:$0xff]
    %v1030 = vld [vmem:[#allocation4 + $0x10] sm:$0xff]
    %v1031 = vld [vmem:[#allocation4 + $0x18] sm:$0xff]
    %v1032 = vld [vmem:[#allocation4 + $0x20] sm:$0xff]
    %v1033 = vld [vmem:[#allocation4 + $0x28] sm:$0xff]
    %v1034 = vld [vmem:[#allocation4 + $0x30] sm:$0xff]
    %v1035 = vld [vmem:[#allocation4 + $0x38] sm:$0xff]
    %v1036 = vld [vmem:[#allocation4 + $0x40] sm:$0xff]
    %v1037 = vld [vmem:[#allocation4 + $0x48] sm:$0xff]
    %v1038 = vld [vmem:[#allocation4 + $0x50] sm:$0xff]
    %v1039 = vld [vmem:[#allocation4 + $0x58] sm:$0xff]
    %v1040 = vld [vmem:[#allocation4 + $0x60] sm:$0xff]
    %v1041 = vld [vmem:[#allocation4 + $0x68] sm:$0xff]
    %v1042 = vld [vmem:[#allocation4 + $0x70] sm:$0xff]
    %v1043 = vld [vmem:[#allocation4 + $0x78] sm:$0xff]
    %v1044 = vsub.f32 %v1028, 1.0
    %v1045 = vsub.f32 %v1029, 1.0
    %v1046 = vsub.f32 %v1030, 1.0
    %v1047 = vsub.f32 %v1031, 1.0
    %v1048 = vsub.f32 %v1032, 1.0
    %v1049 = vsub.f32 %v1033, 1.0
    %v1050 = vsub.f32 %v1034, 1.0
    %v1051 = vsub.f32 %v1035, 1.0
    %v1052 = vsub.f32 %v1036, 1.0
    %v1053 = vsub.f32 %v1037, 1.0
    %v1054 = vsub.f32 %v1038, 1.0
    %v1055 = vsub.f32 %v1039, 1.0
    %v1056 = vsub.f32 %v1040, 1.0
    %v1057 = vsub.f32 %v1041, 1.0
    %v1058 = vsub.f32 %v1042, 1.0
    %v1059 = vsub.f32 %v1043, 1.0
    %vm1060 = vcmp.gt.f32.partialorder %v1044, 0.0
    %vm1061 = vcmp.gt.f32.partialorder %v1045, 0.0
    %vm1062 = vcmp.gt.f32.partialorder %v1046, 0.0
    %vm1063 = vcmp.gt.f32.partialorder %v1047, 0.0
    %vm1064 = vcmp.gt.f32.partialorder %v1048, 0.0
    %vm1065 = vcmp.gt.f32.partialorder %v1049, 0.0
    %vm1066 = vcmp.gt.f32.partialorder %v1050, 0.0
    %vm1067 = vcmp.gt.f32.partialorder %v1051, 0.0
    %vm1068 = vcmp.gt.f32.partialorder %v1052, 0.0
    %vm1069 = vcmp.gt.f32.partialorder %v1053, 0.0
    %vm1070 = vcmp.gt.f32.partialorder %v1054, 0.0
    %vm1071 = vcmp.gt.f32.partialorder %v1055, 0.0
    %vm1072 = vcmp.gt.f32.partialorder %v1056, 0.0
    %vm1073 = vcmp.gt.f32.partialorder %v1057, 0.0
    %vm1074 = vcmp.gt.f32.partialorder %v1058, 0.0
    %vm1075 = vcmp.gt.f32.partialorder %v1059, 0.0
    %v1076 = vsel %vm1060, %v1044, 1.0
    %v1077 = vsel %vm1061, %v1045, 1.0
    %v1078 = vsel %vm1062, %v1046, 1.0
    %v1079 = vsel %vm1063, %v1047, 1.0
    %v1080 = vsel %vm1064, %v1048, 1.0
    %v1081 = vsel %vm1065, %v1049, 1.0
    %v1082 = vsel %vm1066, %v1050, 1.0
    %v1083 = vsel %vm1067, %v1051, 1.0
    %v1084 = vsel %vm1068, %v1052, 1.0
    %v1085 = vsel %vm1069, %v1053, 1.0
    %v1086 = vsel %vm1070, %v1054, 1.0
    %v1087 = vsel %vm1071, %v1055, 1.0
    %v1088 = vsel %vm1072, %v1056, 1.0
    %v1089 = vsel %vm1073, %v1057, 1.0
    %v1090 = vsel %vm1074, %v1058, 1.0
    %v1091 = vsel %vm1075, %v1059, 1.0
    %vm1092 = vcmp.gt.f32.partialorder %v1012, 0.0
    %vm1093 = vcmp.gt.f32.partialorder %v1013, 0.0
    %vm1094 = vcmp.gt.f32.partialorder %v1014, 0.0
    %vm1095 = vcmp.gt.f32.partialorder %v1015, 0.0
    %vm1096 = vcmp.gt.f32.partialorder %v1016, 0.0
    %vm1097 = vcmp.gt.f32.partialorder %v1017, 0.0
    %vm1098 = vcmp.gt.f32.partialorder %v1018, 0.0
    %vm1099 = vcmp.gt.f32.partialorder %v1019, 0.0
    %vm1100 = vcmp.gt.f32.partialorder %v1020, 0.0
    %vm1101 = vcmp.gt.f32.partialorder %v1021, 0.0
    %vm1102 = vcmp.gt.f32.partialorder %v1022, 0.0
    %vm1103 = vcmp.gt.f32.partialorder %v1023, 0.0
    %vm1104 = vcmp.gt.f32.partialorder %v1024, 0.0
    %vm1105 = vcmp.gt.f32.partialorder %v1025, 0.0
    %vm1106 = vcmp.gt.f32.partialorder %v1026, 0.0
    %vm1107 = vcmp.gt.f32.partialorder %v1027, 0.0
    %v1108 = vsel %vm1092, %v1012, 1.0
    %v1109 = vsel %vm1093, %v1013, 1.0
    %v1110 = vsel %vm1094, %v1014, 1.0
    %v1111 = vsel %vm1095, %v1015, 1.0
    %v1112 = vsel %vm1096, %v1016, 1.0
    %v1113 = vsel %vm1097, %v1017, 1.0
    %v1114 = vsel %vm1098, %v1018, 1.0
    %v1115 = vsel %vm1099, %v1019, 1.0
    %v1116 = vsel %vm1100, %v1020, 1.0
    %v1117 = vsel %vm1101, %v1021, 1.0
    %v1118 = vsel %vm1102, %v1022, 1.0
    %v1119 = vsel %vm1103, %v1023, 1.0
    %v1120 = vsel %vm1104, %v1024, 1.0
    %v1121 = vsel %vm1105, %v1025, 1.0
    %v1122 = vsel %vm1106, %v1026, 1.0
    %v1123 = vsel %vm1107, %v1027, 1.0
    %v1124 = vld [vmem:[#allocation3] sm:$0xff]
    %v1125 = vld [vmem:[#allocation3 + $0x8] sm:$0xff]
    %v1126 = vld [vmem:[#allocation3 + $0x10] sm:$0xff]
    %v1127 = vld [vmem:[#allocation3 + $0x18] sm:$0xff]
    %v1128 = vld [vmem:[#allocation3 + $0x20] sm:$0xff]
    %v1129 = vld [vmem:[#allocation3 + $0x28] sm:$0xff]
    %v1130 = vld [vmem:[#allocation3 + $0x30] sm:$0xff]
    %v1131 = vld [vmem:[#allocation3 + $0x38] sm:$0xff]
    %v1132 = vld [vmem:[#allocation3 + $0x40] sm:$0xff]
    %v1133 = vld [vmem:[#allocation3 + $0x48] sm:$0xff]
    %v1134 = vld [vmem:[#allocation3 + $0x50] sm:$0xff]
    %v1135 = vld [vmem:[#allocation3 + $0x58] sm:$0xff]
    %v1136 = vld [vmem:[#allocation3 + $0x60] sm:$0xff]
    %v1137 = vld [vmem:[#allocation3 + $0x68] sm:$0xff]
    %v1138 = vld [vmem:[#allocation3 + $0x70] sm:$0xff]
    %v1139 = vld [vmem:[#allocation3 + $0x78] sm:$0xff]
    %v1140 = vsub.f32 %v1124, %v932
    %v1141 = vsub.f32 %v1125, %v933
    %v1142 = vsub.f32 %v1126, %v934
    %v1143 = vsub.f32 %v1127, %v935
    %v1144 = vsub.f32 %v1128, %v936
    %v1145 = vsub.f32 %v1129, %v937
    %v1146 = vsub.f32 %v1130, %v938
    %v1147 = vsub.f32 %v1131, %v939
    %v1148 = vsub.f32 %v1132, %v940
    %v1149 = vsub.f32 %v1133, %v941
    %v1150 = vsub.f32 %v1134, %v942
    %v1151 = vsub.f32 %v1135, %v943
    %v1152 = vsub.f32 %v1136, %v944
    %v1153 = vsub.f32 %v1137, %v945
    %v1154 = vsub.f32 %v1138, %v946
    %v1155 = vsub.f32 %v1139, %v947
    %v1156 = vmul.f32 %v1044, 10.0
    %v1157 = vmul.f32 %v1045, 10.0
    %v1158 = vmul.f32 %v1046, 10.0
    %v1159 = vmul.f32 %v1047, 10.0
    %v1160 = vmul.f32 %v1048, 10.0
    %v1161 = vmul.f32 %v1049, 10.0
    %v1162 = vmul.f32 %v1050, 10.0
    %v1163 = vmul.f32 %v1051, 10.0
    %v1164 = vmul.f32 %v1052, 10.0
    %v1165 = vmul.f32 %v1053, 10.0
    %v1166 = vmul.f32 %v1054, 10.0
    %v1167 = vmul.f32 %v1055, 10.0
    %v1168 = vmul.f32 %v1056, 10.0
    %v1169 = vmul.f32 %v1057, 10.0
    %v1170 = vmul.f32 %v1058, 10.0
    %v1171 = vmul.f32 %v1059, 10.0
    %v1172 = vsub.f32 %v1140, %v1156
    %v1173 = vsub.f32 %v1141, %v1157
    %v1174 = vsub.f32 %v1142, %v1158
    %v1175 = vsub.f32 %v1143, %v1159
    %v1176 = vsub.f32 %v1144, %v1160
    %v1177 = vsub.f32 %v1145, %v1161
    %v1178 = vsub.f32 %v1146, %v1162
    %v1179 = vsub.f32 %v1147, %v1163
    %v1180 = vsub.f32 %v1148, %v1164
    %v1181 = vsub.f32 %v1149, %v1165
    %v1182 = vsub.f32 %v1150, %v1166
    %v1183 = vsub.f32 %v1151, %v1167
    %v1184 = vsub.f32 %v1152, %v1168
    %v1185 = vsub.f32 %v1153, %v1169
    %v1186 = vsub.f32 %v1154, %v1170
    %v1187 = vsub.f32 %v1155, %v1171
    %v1188 = vlog2.pop %v1108
    %v1189 = vmul.f32 %v1188, 0.6931472
    %v1190 = vlog2.pop %v1109
    %v1191 = vmul.f32 %v1190, 0.6931472
    %v1192 = vlog2.pop %v1110
    %v1193 = vmul.f32 %v1192, 0.6931472
    %v1194 = vlog2.pop %v1111
    %v1195 = vmul.f32 %v1194, 0.6931472
    %v1196 = vlog2.pop %v1112
    %v1197 = vmul.f32 %v1196, 0.6931472
    %v1198 = vlog2.pop %v1113
    %v1199 = vmul.f32 %v1198, 0.6931472
    %v1200 = vlog2.pop %v1114
    %v1201 = vmul.f32 %v1200, 0.6931472
    %v1202 = vlog2.pop %v1115
    %v1203 = vmul.f32 %v1202, 0.6931472
    %v1204 = vlog2.pop %v1116
    %v1205 = vmul.f32 %v1204, 0.6931472
    %v1206 = vlog2.pop %v1117
    %v1207 = vmul.f32 %v1206, 0.6931472
    %v1208 = vlog2.pop %v1118
    %v1209 = vmul.f32 %v1208, 0.6931472
    %v1210 = vlog2.pop %v1119
    %v1211 = vmul.f32 %v1210, 0.6931472
    %v1212 = vlog2.pop %v1120
    %v1213 = vmul.f32 %v1212, 0.6931472
    %v1214 = vlog2.pop %v1121
    %v1215 = vmul.f32 %v1214, 0.6931472
    %v1216 = vlog2.pop %v1122
    %v1217 = vmul.f32 %v1216, 0.6931472
    %v1218 = vlog2.pop %v1123
    %v1219 = vmul.f32 %v1218, 0.6931472
    %v1220 = vmul.f32 %v1044, %v1189
    %v1221 = vmul.f32 %v1045, %v1191
    %v1222 = vmul.f32 %v1046, %v1193
    %v1223 = vmul.f32 %v1047, %v1195
    %v1224 = vmul.f32 %v1048, %v1197
    %v1225 = vmul.f32 %v1049, %v1199
    %v1226 = vmul.f32 %v1050, %v1201
    %v1227 = vmul.f32 %v1051, %v1203
    %v1228 = vmul.f32 %v1052, %v1205
    %v1229 = vmul.f32 %v1053, %v1207
    %v1230 = vmul.f32 %v1054, %v1209
    %v1231 = vmul.f32 %v1055, %v1211
    %v1232 = vmul.f32 %v1056, %v1213
    %v1233 = vmul.f32 %v1057, %v1215
    %v1234 = vmul.f32 %v1058, %v1217
    %v1235 = vmul.f32 %v1059, %v1219
    %v1236 = vsub.f32 %v1172, %v1220
    %v1237 = vsub.f32 %v1173, %v1221
    %v1238 = vsub.f32 %v1174, %v1222
    %v1239 = vsub.f32 %v1175, %v1223
    %v1240 = vsub.f32 %v1176, %v1224
    %v1241 = vsub.f32 %v1177, %v1225
    %v1242 = vsub.f32 %v1178, %v1226
    %v1243 = vsub.f32 %v1179, %v1227
    %v1244 = vsub.f32 %v1180, %v1228
    %v1245 = vsub.f32 %v1181, %v1229
    %v1246 = vsub.f32 %v1182, %v1230
    %v1247 = vsub.f32 %v1183, %v1231
    %v1248 = vsub.f32 %v1184, %v1232
    %v1249 = vsub.f32 %v1185, %v1233
    %v1250 = vsub.f32 %v1186, %v1234
    %v1251 = vsub.f32 %v1187, %v1235
    %v1252 = vsub.f32 0.0, %v1236
    %v1253 = vsub.f32 0.0, %v1237
    %v1254 = vsub.f32 0.0, %v1238
    %v1255 = vsub.f32 0.0, %v1239
    %v1256 = vsub.f32 0.0, %v1240
    %v1257 = vsub.f32 0.0, %v1241
    %v1258 = vsub.f32 0.0, %v1242
    %v1259 = vsub.f32 0.0, %v1243
    %v1260 = vsub.f32 0.0, %v1244
    %v1261 = vsub.f32 0.0, %v1245
    %v1262 = vsub.f32 0.0, %v1246
    %v1263 = vsub.f32 0.0, %v1247
    %v1264 = vsub.f32 0.0, %v1248
    %v1265 = vsub.f32 0.0, %v1249
    %v1266 = vsub.f32 0.0, %v1250
    %v1267 = vsub.f32 0.0, %v1251
    %v1268 = vrcp.pop %v1076
    %v1269 = vmul.f32 %v1252, %v1268
    %v1270 = vrcp.pop %v1077
    %v1271 = vmul.f32 %v1253, %v1270
    %v1272 = vrcp.pop %v1078
    %v1273 = vmul.f32 %v1254, %v1272
    %v1274 = vrcp.pop %v1079
    %v1275 = vmul.f32 %v1255, %v1274
    %v1276 = vrcp.pop %v1080
    %v1277 = vmul.f32 %v1256, %v1276
    %v1278 = vrcp.pop %v1081
    %v1279 = vmul.f32 %v1257, %v1278
    %v1280 = vrcp.pop %v1082
    %v1281 = vmul.f32 %v1258, %v1280
    %v1282 = vrcp.pop %v1083
    %v1283 = vmul.f32 %v1259, %v1282
    %v1284 = vrcp.pop %v1084
    %v1285 = vmul.f32 %v1260, %v1284
    %v1286 = vrcp.pop %v1085
    %v1287 = vmul.f32 %v1261, %v1286
    %v1288 = vrcp.pop %v1086
    %v1289 = vmul.f32 %v1262, %v1288
    %v1290 = vrcp.pop %v1087
    %v1291 = vmul.f32 %v1263, %v1290
    %v1292 = vrcp.pop %v1088
    %v1293 = vmul.f32 %v1264, %v1292
    %v1294 = vrcp.pop %v1089
    %v1295 = vmul.f32 %v1265, %v1294
    %v1296 = vrcp.pop %v1090
    %v1297 = vmul.f32 %v1266, %v1296
    %v1298 = vrcp.pop %v1091
    %v1299 = vmul.f32 %v1267, %v1298
    %v1300 = vsel %vm1060, %v1269, 0.0
    %v1301 = vsel %vm1061, %v1271, 0.0
    %v1302 = vsel %vm1062, %v1273, 0.0
    %v1303 = vsel %vm1063, %v1275, 0.0
    %v1304 = vsel %vm1064, %v1277, 0.0
    %v1305 = vsel %vm1065, %v1279, 0.0
    %v1306 = vsel %vm1066, %v1281, 0.0
    %v1307 = vsel %vm1067, %v1283, 0.0
    %v1308 = vsel %vm1068, %v1285, 0.0
    %v1309 = vsel %vm1069, %v1287, 0.0
    %v1310 = vsel %vm1070, %v1289, 0.0
    %v1311 = vsel %vm1071, %v1291, 0.0
    %v1312 = vsel %vm1072, %v1293, 0.0
    %v1313 = vsel %vm1073, %v1295, 0.0
    %v1314 = vsel %vm1074, %v1297, 0.0
    %v1315 = vsel %vm1075, %v1299, 0.0
    %v1316 = vmul.f32 %v1300, 0.1
    %v1317 = vmul.f32 %v1301, 0.1
    %v1318 = vmul.f32 %v1302, 0.1
    %v1319 = vmul.f32 %v1303, 0.1
    %v1320 = vmul.f32 %v1304, 0.1
    %v1321 = vmul.f32 %v1305, 0.1
    %v1322 = vmul.f32 %v1306, 0.1
    %v1323 = vmul.f32 %v1307, 0.1
    %v1324 = vmul.f32 %v1308, 0.1
    %v1325 = vmul.f32 %v1309, 0.1
    %v1326 = vmul.f32 %v1310, 0.1
    %v1327 = vmul.f32 %v1311, 0.1
    %v1328 = vmul.f32 %v1312, 0.1
    %v1329 = vmul.f32 %v1313, 0.1
    %v1330 = vmul.f32 %v1314, 0.1
    %v1331 = vmul.f32 %v1315, 0.1
    %1332 = vst.msk [vmem:[%s5] sm:$0xff] %vm633, %v1316
    %1333 = vst.msk [vmem:[%s5 + $0x8] sm:$0xff] %vm633, %v1317
    %1334 = vst.msk [vmem:[%s5 + $0x10] sm:$0xff] %vm633, %v1318
    %1335 = vst.msk [vmem:[%s5 + $0x18] sm:$0xff] %vm633, %v1319
    %1336 = vst.msk [vmem:[%s5 + $0x20] sm:$0xff] %vm633, %v1320
    %1337 = vst.msk [vmem:[%s5 + $0x28] sm:$0xff] %vm633, %v1321
    %1338 = vst.msk [vmem:[%s5 + $0x30] sm:$0xff] %vm633, %v1322
    %1339 = vst.msk [vmem:[%s5 + $0x38] sm:$0xff] %vm633, %v1323
    %1340 = vst.msk [vmem:[%s5 + $0x40] sm:$0xff] %vm633, %v1324
    %1341 = vst.msk [vmem:[%s5 + $0x48] sm:$0xff] %vm633, %v1325
    %1342 = vst.msk [vmem:[%s5 + $0x50] sm:$0xff] %vm633, %v1326
    %1343 = vst.msk [vmem:[%s5 + $0x58] sm:$0xff] %vm633, %v1327
    %1344 = vst.msk [vmem:[%s5 + $0x60] sm:$0xff] %vm633, %v1328
    %1345 = vst.msk [vmem:[%s5 + $0x68] sm:$0xff] %vm633, %v1329
    %1346 = vst.msk [vmem:[%s5 + $0x70] sm:$0xff] %vm633, %v1330
    %1347 = vst.msk [vmem:[%s5 + $0x78] sm:$0xff] %vm633, %v1331
    %v1348 = vsel %vm1060, 1, 0
    %v1349 = vsel %vm1061, 1, 0
    %v1350 = vsel %vm1062, 1, 0
    %v1351 = vsel %vm1063, 1, 0
    %v1352 = vsel %vm1064, 1, 0
    %v1353 = vsel %vm1065, 1, 0
    %v1354 = vsel %vm1066, 1, 0
    %v1355 = vsel %vm1067, 1, 0
    %v1356 = vsel %vm1068, 1, 0
    %v1357 = vsel %vm1069, 1, 0
    %v1358 = vsel %vm1070, 1, 0
    %v1359 = vsel %vm1071, 1, 0
    %v1360 = vsel %vm1072, 1, 0
    %v1361 = vsel %vm1073, 1, 0
    %v1362 = vsel %vm1074, 1, 0
    %v1363 = vsel %vm1075, 1, 0
    %v1364 = vcvt.s32.f32 %v1348
    %v1365 = vcvt.s32.f32 %v1349
    %v1366 = vcvt.s32.f32 %v1350
    %v1367 = vcvt.s32.f32 %v1351
    %v1368 = vcvt.s32.f32 %v1352
    %v1369 = vcvt.s32.f32 %v1353
    %v1370 = vcvt.s32.f32 %v1354
    %v1371 = vcvt.s32.f32 %v1355
    %v1372 = vcvt.s32.f32 %v1356
    %v1373 = vcvt.s32.f32 %v1357
    %v1374 = vcvt.s32.f32 %v1358
    %v1375 = vcvt.s32.f32 %v1359
    %v1376 = vcvt.s32.f32 %v1360
    %v1377 = vcvt.s32.f32 %v1361
    %v1378 = vcvt.s32.f32 %v1362
    %v1379 = vcvt.s32.f32 %v1363
    %1380 = vst.msk [vmem:[%s6] sm:$0xff] %vm633, %v1364
    %1381 = vst.msk [vmem:[%s6 + $0x8] sm:$0xff] %vm633, %v1365
    %1382 = vst.msk [vmem:[%s6 + $0x10] sm:$0xff] %vm633, %v1366
    %1383 = vst.msk [vmem:[%s6 + $0x18] sm:$0xff] %vm633, %v1367
    %1384 = vst.msk [vmem:[%s6 + $0x20] sm:$0xff] %vm633, %v1368
    %1385 = vst.msk [vmem:[%s6 + $0x28] sm:$0xff] %vm633, %v1369
    %1386 = vst.msk [vmem:[%s6 + $0x30] sm:$0xff] %vm633, %v1370
    %1387 = vst.msk [vmem:[%s6 + $0x38] sm:$0xff] %vm633, %v1371
    %1388 = vst.msk [vmem:[%s6 + $0x40] sm:$0xff] %vm633, %v1372
    %1389 = vst.msk [vmem:[%s6 + $0x48] sm:$0xff] %vm633, %v1373
    %1390 = vst.msk [vmem:[%s6 + $0x50] sm:$0xff] %vm633, %v1374
    %1391 = vst.msk [vmem:[%s6 + $0x58] sm:$0xff] %vm633, %v1375
    %1392 = vst.msk [vmem:[%s6 + $0x60] sm:$0xff] %vm633, %v1376
    %1393 = vst.msk [vmem:[%s6 + $0x68] sm:$0xff] %vm633, %v1377
    %1394 = vst.msk [vmem:[%s6 + $0x70] sm:$0xff] %vm633, %v1378
    %1395 = vst.msk [vmem:[%s6 + $0x78] sm:$0xff] %vm633, %v1379
  $region33: #{tpu_custom_call.1} parent=0 // pred_fallthru
    _
  // Predicated region
  $region34: #{tpu_custom_call.1} parent=0 // pred_check
    _
  $region35: #{tpu_custom_call.1} parent=0 // pred_check_branch
    %1397 = sbr.rel (0) target = $region37
  $region36: #{tpu_custom_call.1} parent=0 // pred_region
    _
  $region37: #{tpu_custom_call.1} parent=0 // pred_fallthru
    _
  // Predicated region
  $region38: #{tpu_custom_call.1} parent=0 // pred_check
    _
  $region39: #{tpu_custom_call.1} parent=0 // pred_check_branch
    %1399 = sbr.rel (0) target = $region41
  $region40: #{tpu_custom_call.1} parent=0 // pred_region
    _
  $region41: #{tpu_custom_call.1} parent=0 // pred_fallthru
    _
  // Predicated region
  $region42: #{tpu_custom_call.1} parent=0 // pred_check
    _
  $region43: #{tpu_custom_call.1} parent=0 // pred_check_branch
    %1401 = sbr.rel (0) target = $region45
  $region44: #{tpu_custom_call.1} parent=0 // pred_region
    _
  $region45: #{tpu_custom_call.1} parent=0 // pred_fallthru
    _
  // Predicated region
  $region46: #{tpu_custom_call.1} parent=0 // pred_check
    _
  $region47: #{tpu_custom_call.1} parent=0 // pred_check_branch
    %1403 = sbr.rel (0) target = $region49
  $region48: #{tpu_custom_call.1} parent=0 // pred_region
    _
  $region49: #{tpu_custom_call.1} parent=0 // pred_fallthru
    _

</llo_original>
